<compile_context>
chip_gen: v7x
topology: tpu7x:2x2x1
jax: 0.10.0
libtpu: 0.0.40
codegen_flags: <defaults>
</compile_context>

<pallas_src>
import functools
import math

import jax
import jax.numpy as jnp
from jax import lax
from jax.experimental import pallas as pl
from jax.experimental.pallas import tpu as pltpu


# ----------------------------------------------------------------------------
# Pallas kernel: the whole FAN layer stack.  grid = (num_layers,).
# ----------------------------------------------------------------------------
def _fan_stack_kernel(x_ref,
                      wqkv_ref, bqkv_ref, wo_ref, bo_ref,
                      ln1g_ref, ln1b_ref,
                      wfan_ref, bfan_ref, gate_ref,
                      ln2g_ref, ln2b_ref,
                      o_ref,
                      attn_sc,
                      *, batch, seq, hidden, num_heads):
    layer = pl.program_id(0)

    # Layer 0: seed the resident activation (output block, constant index map
    # across the layer axis => stays in VMEM for the whole grid).
    @pl.when(layer == 0)
    def _():
        o_ref[...] = x_ref[...]

    h2 = o_ref[...]                                  # (B*S, H) float32
    rows = batch * seq
    dh = hidden // num_heads
    p_dim = hidden // 4
    scale = 1.0 / math.sqrt(dh)

    def mm(a, w_ref, b_ref):
        # bf16 MXU inputs, f32 accumulation, f32 bias.
        return (jnp.dot(a.astype(jnp.bfloat16), w_ref[0],
                        preferred_element_type=jnp.float32) + b_ref[0])

    # ---- fused QKV projection -------------------------------------------
    qkv = mm(h2, wqkv_ref, bqkv_ref)                 # (B*S, 3H)
    qkv3 = qkv.reshape(batch, seq, 3 * hidden)       # (B, S, 3H)

    # ---- multi-head self-attention (batched over B, static head loop) ----
    for h in range(num_heads):
        qh = qkv3[:, :, h * dh:(h + 1) * dh].astype(jnp.bfloat16)
        kh = qkv3[:, :, hidden + h * dh:hidden + (h + 1) * dh].astype(jnp.bfloat16)
        vh = qkv3[:, :, 2 * hidden + h * dh:2 * hidden + (h + 1) * dh]

        s = jnp.einsum('bqd,bkd->bqk', qh, kh,
                       preferred_element_type=jnp.float32) * scale
        m = jnp.max(s, axis=-1, keepdims=True)
        p = jnp.exp(s - m)
        a = p * pl.reciprocal(jnp.sum(p, axis=-1, keepdims=True), approx=True)
        oh = jnp.einsum('bqk,bkd->bqd',
                        a.astype(jnp.bfloat16), vh.astype(jnp.bfloat16),
                        preferred_element_type=jnp.float32)   # (B, S, dh)
        attn_sc[:, :, h * dh:(h + 1) * dh] = oh      # merged result, no concat

    attn = attn_sc[...].reshape(rows, hidden)        # (B*S, H)
    attn = mm(attn, wo_ref, bo_ref)                  # output projection

    def layernorm(v, g_ref, b_ref):
        mu = jnp.mean(v, axis=-1, keepdims=True)
        var = jnp.mean((v - mu) ** 2, axis=-1, keepdims=True)
        return (v - mu) * lax.rsqrt(var + 1e-5) * g_ref[0] + b_ref[0]

    # ---- residual + norm1 -------------------------------------------------
    x1 = layernorm(h2 + attn, ln1g_ref, ln1b_ref)

    # ---- FAN block: one fused matmul, per-column activation ---------------
    # columns [0:p)      -> gamma * sin(z)        (z = x1 @ wp + bp + off)
    # columns [p:2p)     -> gamma * cos(z)        (z = x1 @ wp + bp + pi/2 - off)
    # columns [2p:H)     -> (1-gamma) * gelu(z)   (z = x1 @ wg + bg)
    z = mm(x1, wfan_ref, bfan_ref)                   # (B*S, H), phases in bias
    gamma = jax.nn.sigmoid(gate_ref[0])              # (1, 1), broadcasts
    col = lax.broadcasted_iota(jnp.int32, z.shape, 1)
    gelu_z = 0.5 * z * (1.0 + lax.erf(z * (1.0 / math.sqrt(2.0))))  # exact GELU
    fan = jnp.where(col < p_dim, gamma * jnp.sin(z),
                    jnp.where(col < 2 * p_dim, gamma * jnp.cos(z),
                              (1.0 - gamma) * gelu_z))

    # ---- residual + norm2 --------------------------------------------------
    o_ref[...] = layernorm(x1 + fan, ln2g_ref, ln2b_ref)


def fan_layer_stack_pallas(x, stacked, num_heads):
    """Apply the whole FAN layer stack.  x: (B, S, H) float32."""
    B, S, H = x.shape
    L = stacked["wqkv"].shape[0]
    x2d = x.reshape(B * S, H)

    names = ["wqkv", "bqkv", "wo", "bo", "ln1_g", "ln1_b",
             "wfan", "bfan", "gate", "ln2_g", "ln2_b"]
    weights = [stacked[n] for n in names]

    def w_spec(arr):
        zeros = (0,) * (arr.ndim - 1)
        return pl.BlockSpec((1,) + arr.shape[1:],
                            lambda l, _z=zeros: (l,) + _z)

    in_specs = [pl.BlockSpec((B * S, H), lambda l: (0, 0))]
    in_specs += [w_spec(w) for w in weights]

    out = pl.pallas_call(
        functools.partial(_fan_stack_kernel, batch=B, seq=S, hidden=H,
                          num_heads=num_heads),
        out_shape=jax.ShapeDtypeStruct((B * S, H), jnp.float32),
        grid=(L,),
        in_specs=in_specs,
        # Constant index map across the layer axis => activation stays
        # resident in VMEM; written back to HBM once at the end.
        out_specs=pl.BlockSpec((B * S, H), lambda l: (0, 0)),
        scratch_shapes=[pltpu.VMEM((B, S, H), jnp.float32)],
        compiler_params=pltpu.CompilerParams(
            dimension_semantics=("arbitrary",)),
    )(x2d, *weights)
    return out.reshape(B, S, H)


# ----------------------------------------------------------------------------
# Parameter construction (deterministic, synthetic weights).
# ----------------------------------------------------------------------------
def _linear_params(key, fan_in, fan_out):
    kw, kb = jax.random.split(key)
    bound = 1.0 / math.sqrt(fan_in)
    w = jax.random.uniform(kw, (fan_in, fan_out), jnp.float32, -bound, bound)
    b = jax.random.uniform(kb, (fan_out,), jnp.float32, -bound, bound)
    return w, b


def make_pos_encoding(max_seq_len, hidden_dim):
    position = jnp.arange(max_seq_len, dtype=jnp.float32)[:, None]
    div_term = jnp.exp(jnp.arange(0, hidden_dim, 2, dtype=jnp.float32)
                       * -(math.log(10000.0) / hidden_dim))
    pe = jnp.zeros((1, max_seq_len, hidden_dim), jnp.float32)
    pe = pe.at[0, :, 0::2].set(jnp.sin(position * div_term))
    pe = pe.at[0, :, 1::2].set(jnp.cos(position * div_term))
    return pe


def init_params(key, input_dim, output_dim, hidden_dim, num_layers,
                max_seq_len):
    p_dim = hidden_dim // 4
    g_dim = hidden_dim // 2
    keys = jax.random.split(key, 2 + num_layers)

    emb_w, emb_b = _linear_params(keys[0], input_dim, hidden_dim)
    out_w, out_b = _linear_params(keys[1], hidden_dim, output_dim)

    acc = {n: [] for n in ["wqkv", "bqkv", "wo", "bo", "ln1_g", "ln1_b",
                           "wfan", "bfan", "gate", "ln2_g", "ln2_b"]}
    offset = jnp.full((p_dim,), math.pi / 4.0, jnp.float32)
    for li in range(num_layers):
        lk = jax.random.split(keys[2 + li], 8)
        wq, bq = _linear_params(lk[0], hidden_dim, hidden_dim)
        wk, bk = _linear_params(lk[1], hidden_dim, hidden_dim)
        wv, bv = _linear_params(lk[2], hidden_dim, hidden_dim)
        wo, bo = _linear_params(lk[3], hidden_dim, hidden_dim)
        wp, bp = _linear_params(lk[4], hidden_dim, p_dim)
        wg, bg = _linear_params(lk[5], hidden_dim, g_dim)
        gate = jax.random.normal(lk[6], (1,), jnp.float32)

        acc["wqkv"].append(jnp.concatenate([wq, wk, wv], axis=1))      # (H,3H)
        acc["bqkv"].append(jnp.concatenate([bq, bk, bv])[None, :])     # (1,3H)
        acc["wo"].append(wo)
        acc["bo"].append(bo[None, :])
        acc["ln1_g"].append(jnp.ones((1, hidden_dim), jnp.float32))
        acc["ln1_b"].append(jnp.zeros((1, hidden_dim), jnp.float32))
        # Fused FAN weight/bias: [wp | wp | wg], phases folded into the bias.
        acc["wfan"].append(jnp.concatenate([wp, wp, wg], axis=1))      # (H,H)
        acc["bfan"].append(jnp.concatenate(
            [bp + offset, bp + math.pi / 2.0 - offset, bg])[None, :])  # (1,H)
        acc["gate"].append(gate[None, :])                              # (1,1)
        acc["ln2_g"].append(jnp.ones((1, hidden_dim), jnp.float32))
        acc["ln2_b"].append(jnp.zeros((1, hidden_dim), jnp.float32))

    stacked = {n: jnp.stack(v) for n, v in acc.items()}
    # bf16 for the large matmul weights (MXU-native on v6e/v7x, halves DMA);
    # biases / LN params / gate stay f32.
    for n in ("wqkv", "wo", "wfan"):
        stacked[n] = stacked[n].astype(jnp.bfloat16)

    return dict(emb_w=emb_w, emb_b=emb_b, out_w=out_w, out_b=out_b,
                pos_enc=make_pos_encoding(max_seq_len, hidden_dim),
                layers=stacked)


# ----------------------------------------------------------------------------
# Full model forward.
# ----------------------------------------------------------------------------
def fan_transformer_forward(x, params, num_heads):
    # x: (B, S, input_dim) float32
    B, S, _ = x.shape
    # glue: tiny input embedding + fixed positional encoding
    h = jnp.dot(x, params["emb_w"]) + params["emb_b"]
    h = h + params["pos_enc"][:, :S, :]
    # hot path: one fused Pallas kernel for the whole layer stack
    h = fan_layer_stack_pallas(h, params["layers"], num_heads)
    # glue: tiny output projection
    out = jnp.dot(h, params["out_w"]) + params["out_b"]
    return out


if __name__ == "__main__":
    B, S = 2, 8
    INPUT_DIM, OUTPUT_DIM = 1, 1
    HIDDEN, NUM_HEADS, NUM_LAYERS = 32, 4, 2
    MAX_SEQ_LEN = 64

    key = jax.random.PRNGKey(0)
    k_params, k_x = jax.random.split(key)
    params = init_params(k_params, INPUT_DIM, OUTPUT_DIM, HIDDEN,
                         NUM_LAYERS, MAX_SEQ_LEN)
    x = jax.random.normal(k_x, (B, S, INPUT_DIM), jnp.float32)

    out = fan_transformer_forward(x, params, NUM_HEADS)
    out = jax.block_until_ready(out)
    assert out.shape == (B, S, OUTPUT_DIM)
    assert bool(jnp.all(jnp.isfinite(out)))
    print("KERNEL_OK")
</pallas_src>

<mosaic_0001>
module attributes {stable_mosaic.version = 11 : i64} {
  func.func @_fan_stack_kernel(%arg0: i32, %arg1: memref<16x32xf32, #tpu.memory_space<vmem>>, %arg2: memref<1x32x96xbf16, #tpu.memory_space<vmem>>, %arg3: memref<1x1x96xf32, #tpu.memory_space<vmem>>, %arg4: memref<1x32x32xbf16, #tpu.memory_space<vmem>>, %arg5: memref<1x1x32xf32, #tpu.memory_space<vmem>>, %arg6: memref<1x1x32xf32, #tpu.memory_space<vmem>>, %arg7: memref<1x1x32xf32, #tpu.memory_space<vmem>>, %arg8: memref<1x32x32xbf16, #tpu.memory_space<vmem>>, %arg9: memref<1x1x32xf32, #tpu.memory_space<vmem>>, %arg10: memref<1x1x1xf32, #tpu.memory_space<vmem>>, %arg11: memref<1x1x32xf32, #tpu.memory_space<vmem>>, %arg12: memref<1x1x32xf32, #tpu.memory_space<vmem>>, %arg13: memref<16x32xf32, #tpu.memory_space<vmem>>, %arg14: memref<2x8x32xf32, #tpu.memory_space<vmem>>) attributes {dimension_semantics = [#tpu.dimension_semantics<arbitrary>], iteration_bounds = array<i64: 2>, scalar_prefetch = 0 : i64, scratch_operands = 1 : i64, tpu.core_type = #tpu.core_type<tc>, window_params = [{pipeline_mode = #tpu.pipeline_mode<synchronous>, transform_indices = @transform_0, window_bounds = array<i64: 16, 32>}, {transform_indices = @transform_1, window_bounds = array<i64: 1, 32, 96>}, {transform_indices = @transform_2, window_bounds = array<i64: 1, 1, 96>}, {transform_indices = @transform_3, window_bounds = array<i64: 1, 32, 32>}, {transform_indices = @transform_4, window_bounds = array<i64: 1, 1, 32>}, {transform_indices = @transform_5, window_bounds = array<i64: 1, 1, 32>}, {transform_indices = @transform_6, window_bounds = array<i64: 1, 1, 32>}, {transform_indices = @transform_7, window_bounds = array<i64: 1, 32, 32>}, {transform_indices = @transform_8, window_bounds = array<i64: 1, 1, 32>}, {transform_indices = @transform_9, window_bounds = array<i64: 1, 1, 1>}, {transform_indices = @transform_10, window_bounds = array<i64: 1, 1, 32>}, {transform_indices = @transform_11, window_bounds = array<i64: 1, 1, 32>}, {pipeline_mode = #tpu.pipeline_mode<synchronous>, transform_indices = @transform_12, window_bounds = array<i64: 16, 32>}]} {
    %c0_i32 = arith.constant 0 : i32
    %0 = arith.cmpi eq, %arg0, %c0_i32 : i32
    %1 = arith.extui %0 : i1 to i32
    %c0_i32_0 = arith.constant 0 : i32
    %2 = arith.cmpi ne, %1, %c0_i32_0 : i32
    scf.if %2 {
      %c0_86 = arith.constant 0 : index
      %c0_87 = arith.constant 0 : index
      %206 = vector.load %arg1[%c0_86, %c0_87] : memref<16x32xf32, #tpu.memory_space<vmem>>, vector<16x32xf32>
      %c0_88 = arith.constant 0 : index
      %c0_89 = arith.constant 0 : index
      %207 = vector.load %arg13[%c0_88, %c0_89] : memref<16x32xf32, #tpu.memory_space<vmem>>, vector<16x32xf32>
      tpu.vector_store %arg13[%c0_88, %c0_89], %206 {strides = array<i32>} : memref<16x32xf32, #tpu.memory_space<vmem>>, vector<16x32xf32>,
    } else {
    }
    %c0 = arith.constant 0 : index
    %c0_1 = arith.constant 0 : index
    %3 = vector.load %arg13[%c0, %c0_1] : memref<16x32xf32, #tpu.memory_space<vmem>>, vector<16x32xf32>
    %4 = arith.truncf %3 : vector<16x32xf32> to vector<16x32xbf16>
    %c0_2 = arith.constant 0 : index
    %c0_3 = arith.constant 0 : index
    %c0_4 = arith.constant 0 : index
    %5 = vector.load %arg2[%c0_2, %c0_3, %c0_4] : memref<1x32x96xbf16, #tpu.memory_space<vmem>>, vector<1x32x96xbf16>
    %6 = vector.shape_cast %5 : vector<1x32x96xbf16> to vector<32x96xbf16>
    %cst = arith.constant dense<0.000000e+00> : vector<16x96xf32>
    %7 = tpu.matmul %4, %6, %cst {dimension_numbers = #tpu.dot_dimension_numbers<[1], [0], [0], [1], [0, 0, 1, 1], [], []>} : vector<16x32xbf16>, vector<32x96xbf16>, vector<16x96xf32> -> vector<16x96xf32>
    %c0_5 = arith.constant 0 : index
    %c0_6 = arith.constant 0 : index
    %c0_7 = arith.constant 0 : index
    %8 = vector.load %arg3[%c0_5, %c0_6, %c0_7] : memref<1x1x96xf32, #tpu.memory_space<vmem>>, vector<1x1x96xf32>
    %9 = vector.shape_cast %8 : vector<1x1x96xf32> to vector<1x96xf32>
    %10 = vector.broadcast %9 : vector<1x96xf32> to vector<16x96xf32>
    %11 = arith.addf %7, %10 : vector<16x96xf32>
    %12 = vector.shape_cast %11 : vector<16x96xf32> to vector<2x8x96xf32>
    %13 = vector.extract_strided_slice %12 {offsets = [0, 0, 0], sizes = [2, 8, 8], strides = [1, 1, 1]} : vector<2x8x96xf32> to vector<2x8x8xf32>
    %14 = arith.truncf %13 : vector<2x8x8xf32> to vector<2x8x8xbf16>
    %15 = vector.extract_strided_slice %12 {offsets = [0, 0, 32], sizes = [2, 8, 8], strides = [1, 1, 1]} : vector<2x8x96xf32> to vector<2x8x8xf32>
    %16 = arith.truncf %15 : vector<2x8x8xf32> to vector<2x8x8xbf16>
    %17 = vector.extract_strided_slice %12 {offsets = [0, 0, 64], sizes = [2, 8, 8], strides = [1, 1, 1]} : vector<2x8x96xf32> to vector<2x8x8xf32>
    "tpu.trace_start"() <{level = 10 : i32, message = "bqd,bkd->bqk"}> : () -> ()
    %cst_8 = arith.constant dense<0.000000e+00> : vector<2x8x8xf32>
    %18 = tpu.matmul %14, %16, %cst_8 {dimension_numbers = #tpu.dot_dimension_numbers<[2], [2], [1], [1], [0, 0, 0, 1, 1, 1], [0], [0]>} : vector<2x8x8xbf16>, vector<2x8x8xbf16>, vector<2x8x8xf32> -> vector<2x8x8xf32>
    "tpu.trace_stop"() : () -> ()
    %cst_9 = arith.constant 0.353553385 : f32
    %19 = vector.broadcast %cst_9 : f32 to vector<2x8x8xf32>
    %20 = arith.mulf %18, %19 : vector<2x8x8xf32>
    %cst_10 = arith.constant dense<0xFF800000> : vector<2x8xf32>
    %21 = vector.multi_reduction <maximumf>, %20, %cst_10 [2] : vector<2x8x8xf32> to vector<2x8xf32>
    %22 = vector.shape_cast %21 : vector<2x8xf32> to vector<2x8x1xf32>
    %23 = vector.broadcast %22 : vector<2x8x1xf32> to vector<2x8x8xf32>
    %24 = arith.subf %20, %23 : vector<2x8x8xf32>
    %25 = math.exp %24 : vector<2x8x8xf32>
    %cst_11 = arith.constant dense<0.000000e+00> : vector<2x8xf32>
    %26 = vector.multi_reduction <add>, %25, %cst_11 [2] : vector<2x8x8xf32> to vector<2x8xf32>
    %27 = vector.shape_cast %26 : vector<2x8xf32> to vector<2x8x1xf32>
    %28 = tpu.reciprocal %27 {approx = true} : vector<2x8x1xf32> -> vector<2x8x1xf32>
    %29 = vector.broadcast %28 : vector<2x8x1xf32> to vector<2x8x8xf32>
    %30 = arith.mulf %25, %29 : vector<2x8x8xf32>
    %31 = arith.truncf %30 : vector<2x8x8xf32> to vector<2x8x8xbf16>
    %32 = arith.truncf %17 : vector<2x8x8xf32> to vector<2x8x8xbf16>
    "tpu.trace_start"() <{level = 10 : i32, message = "bqk,bkd->bqd"}> : () -> ()
    %cst_12 = arith.constant dense<0.000000e+00> : vector<2x8x8xf32>
    %33 = tpu.matmul %31, %32, %cst_12 {dimension_numbers = #tpu.dot_dimension_numbers<[2], [1], [1], [2], [0, 0, 0, 1, 1, 2], [0], [0]>} : vector<2x8x8xbf16>, vector<2x8x8xbf16>, vector<2x8x8xf32> -> vector<2x8x8xf32>
    "tpu.trace_stop"() : () -> ()
    %c0_13 = arith.constant 0 : index
    %c0_14 = arith.constant 0 : index
    %c0_15 = arith.constant 0 : index
    %34 = vector.load %arg14[%c0_13, %c0_14, %c0_15] : memref<2x8x32xf32, #tpu.memory_space<vmem>>, vector<2x8x8xf32>
    tpu.vector_store %arg14[%c0_13, %c0_14, %c0_15], %33 {strides = array<i32>} : memref<2x8x32xf32, #tpu.memory_space<vmem>>, vector<2x8x8xf32>,
    %35 = vector.extract_strided_slice %12 {offsets = [0, 0, 8], sizes = [2, 8, 8], strides = [1, 1, 1]} : vector<2x8x96xf32> to vector<2x8x8xf32>
    %36 = arith.truncf %35 : vector<2x8x8xf32> to vector<2x8x8xbf16>
    %37 = vector.extract_strided_slice %12 {offsets = [0, 0, 40], sizes = [2, 8, 8], strides = [1, 1, 1]} : vector<2x8x96xf32> to vector<2x8x8xf32>
    %38 = arith.truncf %37 : vector<2x8x8xf32> to vector<2x8x8xbf16>
    %39 = vector.extract_strided_slice %12 {offsets = [0, 0, 72], sizes = [2, 8, 8], strides = [1, 1, 1]} : vector<2x8x96xf32> to vector<2x8x8xf32>
    "tpu.trace_start"() <{level = 10 : i32, message = "bqd,bkd->bqk"}> : () -> ()
    %cst_16 = arith.constant dense<0.000000e+00> : vector<2x8x8xf32>
    %40 = tpu.matmul %36, %38, %cst_16 {dimension_numbers = #tpu.dot_dimension_numbers<[2], [2], [1], [1], [0, 0, 0, 1, 1, 1], [0], [0]>} : vector<2x8x8xbf16>, vector<2x8x8xbf16>, vector<2x8x8xf32> -> vector<2x8x8xf32>
    "tpu.trace_stop"() : () -> ()
    %cst_17 = arith.constant 0.353553385 : f32
    %41 = vector.broadcast %cst_17 : f32 to vector<2x8x8xf32>
    %42 = arith.mulf %40, %41 : vector<2x8x8xf32>
    %cst_18 = arith.constant dense<0xFF800000> : vector<2x8xf32>
    %43 = vector.multi_reduction <maximumf>, %42, %cst_18 [2] : vector<2x8x8xf32> to vector<2x8xf32>
    %44 = vector.shape_cast %43 : vector<2x8xf32> to vector<2x8x1xf32>
    %45 = vector.broadcast %44 : vector<2x8x1xf32> to vector<2x8x8xf32>
    %46 = arith.subf %42, %45 : vector<2x8x8xf32>
    %47 = math.exp %46 : vector<2x8x8xf32>
    %cst_19 = arith.constant dense<0.000000e+00> : vector<2x8xf32>
    %48 = vector.multi_reduction <add>, %47, %cst_19 [2] : vector<2x8x8xf32> to vector<2x8xf32>
    %49 = vector.shape_cast %48 : vector<2x8xf32> to vector<2x8x1xf32>
    %50 = tpu.reciprocal %49 {approx = true} : vector<2x8x1xf32> -> vector<2x8x1xf32>
    %51 = vector.broadcast %50 : vector<2x8x1xf32> to vector<2x8x8xf32>
    %52 = arith.mulf %47, %51 : vector<2x8x8xf32>
    %53 = arith.truncf %52 : vector<2x8x8xf32> to vector<2x8x8xbf16>
    %54 = arith.truncf %39 : vector<2x8x8xf32> to vector<2x8x8xbf16>
    "tpu.trace_start"() <{level = 10 : i32, message = "bqk,bkd->bqd"}> : () -> ()
    %cst_20 = arith.constant dense<0.000000e+00> : vector<2x8x8xf32>
    %55 = tpu.matmul %53, %54, %cst_20 {dimension_numbers = #tpu.dot_dimension_numbers<[2], [1], [1], [2], [0, 0, 0, 1, 1, 2], [0], [0]>} : vector<2x8x8xbf16>, vector<2x8x8xbf16>, vector<2x8x8xf32> -> vector<2x8x8xf32>
    "tpu.trace_stop"() : () -> ()
    %c0_21 = arith.constant 0 : index
    %c0_22 = arith.constant 0 : index
    %c8 = arith.constant 8 : index
    %56 = vector.load %arg14[%c0_21, %c0_22, %c8] : memref<2x8x32xf32, #tpu.memory_space<vmem>>, vector<2x8x8xf32>
    tpu.vector_store %arg14[%c0_21, %c0_22, %c8], %55 {strides = array<i32>} : memref<2x8x32xf32, #tpu.memory_space<vmem>>, vector<2x8x8xf32>,
    %57 = vector.extract_strided_slice %12 {offsets = [0, 0, 16], sizes = [2, 8, 8], strides = [1, 1, 1]} : vector<2x8x96xf32> to vector<2x8x8xf32>
    %58 = arith.truncf %57 : vector<2x8x8xf32> to vector<2x8x8xbf16>
    %59 = vector.extract_strided_slice %12 {offsets = [0, 0, 48], sizes = [2, 8, 8], strides = [1, 1, 1]} : vector<2x8x96xf32> to vector<2x8x8xf32>
    %60 = arith.truncf %59 : vector<2x8x8xf32> to vector<2x8x8xbf16>
    %61 = vector.extract_strided_slice %12 {offsets = [0, 0, 80], sizes = [2, 8, 8], strides = [1, 1, 1]} : vector<2x8x96xf32> to vector<2x8x8xf32>
    "tpu.trace_start"() <{level = 10 : i32, message = "bqd,bkd->bqk"}> : () -> ()
    %cst_23 = arith.constant dense<0.000000e+00> : vector<2x8x8xf32>
    %62 = tpu.matmul %58, %60, %cst_23 {dimension_numbers = #tpu.dot_dimension_numbers<[2], [2], [1], [1], [0, 0, 0, 1, 1, 1], [0], [0]>} : vector<2x8x8xbf16>, vector<2x8x8xbf16>, vector<2x8x8xf32> -> vector<2x8x8xf32>
    "tpu.trace_stop"() : () -> ()
    %cst_24 = arith.constant 0.353553385 : f32
    %63 = vector.broadcast %cst_24 : f32 to vector<2x8x8xf32>
    %64 = arith.mulf %62, %63 : vector<2x8x8xf32>
    %cst_25 = arith.constant dense<0xFF800000> : vector<2x8xf32>
    %65 = vector.multi_reduction <maximumf>, %64, %cst_25 [2] : vector<2x8x8xf32> to vector<2x8xf32>
    %66 = vector.shape_cast %65 : vector<2x8xf32> to vector<2x8x1xf32>
    %67 = vector.broadcast %66 : vector<2x8x1xf32> to vector<2x8x8xf32>
    %68 = arith.subf %64, %67 : vector<2x8x8xf32>
    %69 = math.exp %68 : vector<2x8x8xf32>
    %cst_26 = arith.constant dense<0.000000e+00> : vector<2x8xf32>
    %70 = vector.multi_reduction <add>, %69, %cst_26 [2] : vector<2x8x8xf32> to vector<2x8xf32>
    %71 = vector.shape_cast %70 : vector<2x8xf32> to vector<2x8x1xf32>
    %72 = tpu.reciprocal %71 {approx = true} : vector<2x8x1xf32> -> vector<2x8x1xf32>
    %73 = vector.broadcast %72 : vector<2x8x1xf32> to vector<2x8x8xf32>
    %74 = arith.mulf %69, %73 : vector<2x8x8xf32>
    %75 = arith.truncf %74 : vector<2x8x8xf32> to vector<2x8x8xbf16>
    %76 = arith.truncf %61 : vector<2x8x8xf32> to vector<2x8x8xbf16>
    "tpu.trace_start"() <{level = 10 : i32, message = "bqk,bkd->bqd"}> : () -> ()
    %cst_27 = arith.constant dense<0.000000e+00> : vector<2x8x8xf32>
    %77 = tpu.matmul %75, %76, %cst_27 {dimension_numbers = #tpu.dot_dimension_numbers<[2], [1], [1], [2], [0, 0, 0, 1, 1, 2], [0], [0]>} : vector<2x8x8xbf16>, vector<2x8x8xbf16>, vector<2x8x8xf32> -> vector<2x8x8xf32>
    "tpu.trace_stop"() : () -> ()
    %c0_28 = arith.constant 0 : index
    %c0_29 = arith.constant 0 : index
    %c16 = arith.constant 16 : index
    %78 = vector.load %arg14[%c0_28, %c0_29, %c16] : memref<2x8x32xf32, #tpu.memory_space<vmem>>, vector<2x8x8xf32>
    tpu.vector_store %arg14[%c0_28, %c0_29, %c16], %77 {strides = array<i32>} : memref<2x8x32xf32, #tpu.memory_space<vmem>>, vector<2x8x8xf32>,
    %79 = vector.extract_strided_slice %12 {offsets = [0, 0, 24], sizes = [2, 8, 8], strides = [1, 1, 1]} : vector<2x8x96xf32> to vector<2x8x8xf32>
    %80 = arith.truncf %79 : vector<2x8x8xf32> to vector<2x8x8xbf16>
    %81 = vector.extract_strided_slice %12 {offsets = [0, 0, 56], sizes = [2, 8, 8], strides = [1, 1, 1]} : vector<2x8x96xf32> to vector<2x8x8xf32>
    %82 = arith.truncf %81 : vector<2x8x8xf32> to vector<2x8x8xbf16>
    %83 = vector.extract_strided_slice %12 {offsets = [0, 0, 88], sizes = [2, 8, 8], strides = [1, 1, 1]} : vector<2x8x96xf32> to vector<2x8x8xf32>
    "tpu.trace_start"() <{level = 10 : i32, message = "bqd,bkd->bqk"}> : () -> ()
    %cst_30 = arith.constant dense<0.000000e+00> : vector<2x8x8xf32>
    %84 = tpu.matmul %80, %82, %cst_30 {dimension_numbers = #tpu.dot_dimension_numbers<[2], [2], [1], [1], [0, 0, 0, 1, 1, 1], [0], [0]>} : vector<2x8x8xbf16>, vector<2x8x8xbf16>, vector<2x8x8xf32> -> vector<2x8x8xf32>
    "tpu.trace_stop"() : () -> ()
    %cst_31 = arith.constant 0.353553385 : f32
    %85 = vector.broadcast %cst_31 : f32 to vector<2x8x8xf32>
    %86 = arith.mulf %84, %85 : vector<2x8x8xf32>
    %cst_32 = arith.constant dense<0xFF800000> : vector<2x8xf32>
    %87 = vector.multi_reduction <maximumf>, %86, %cst_32 [2] : vector<2x8x8xf32> to vector<2x8xf32>
    %88 = vector.shape_cast %87 : vector<2x8xf32> to vector<2x8x1xf32>
    %89 = vector.broadcast %88 : vector<2x8x1xf32> to vector<2x8x8xf32>
    %90 = arith.subf %86, %89 : vector<2x8x8xf32>
    %91 = math.exp %90 : vector<2x8x8xf32>
    %cst_33 = arith.constant dense<0.000000e+00> : vector<2x8xf32>
    %92 = vector.multi_reduction <add>, %91, %cst_33 [2] : vector<2x8x8xf32> to vector<2x8xf32>
    %93 = vector.shape_cast %92 : vector<2x8xf32> to vector<2x8x1xf32>
    %94 = tpu.reciprocal %93 {approx = true} : vector<2x8x1xf32> -> vector<2x8x1xf32>
    %95 = vector.broadcast %94 : vector<2x8x1xf32> to vector<2x8x8xf32>
    %96 = arith.mulf %91, %95 : vector<2x8x8xf32>
    %97 = arith.truncf %96 : vector<2x8x8xf32> to vector<2x8x8xbf16>
    %98 = arith.truncf %83 : vector<2x8x8xf32> to vector<2x8x8xbf16>
    "tpu.trace_start"() <{level = 10 : i32, message = "bqk,bkd->bqd"}> : () -> ()
    %cst_34 = arith.constant dense<0.000000e+00> : vector<2x8x8xf32>
    %99 = tpu.matmul %97, %98, %cst_34 {dimension_numbers = #tpu.dot_dimension_numbers<[2], [1], [1], [2], [0, 0, 0, 1, 1, 2], [0], [0]>} : vector<2x8x8xbf16>, vector<2x8x8xbf16>, vector<2x8x8xf32> -> vector<2x8x8xf32>
    "tpu.trace_stop"() : () -> ()
    %c0_35 = arith.constant 0 : index
    %c0_36 = arith.constant 0 : index
    %c24 = arith.constant 24 : index
    %100 = vector.load %arg14[%c0_35, %c0_36, %c24] : memref<2x8x32xf32, #tpu.memory_space<vmem>>, vector<2x8x8xf32>
    tpu.vector_store %arg14[%c0_35, %c0_36, %c24], %99 {strides = array<i32>} : memref<2x8x32xf32, #tpu.memory_space<vmem>>, vector<2x8x8xf32>,
    %c0_37 = arith.constant 0 : index
    %c0_38 = arith.constant 0 : index
    %c0_39 = arith.constant 0 : index
    %101 = vector.load %arg14[%c0_37, %c0_38, %c0_39] : memref<2x8x32xf32, #tpu.memory_space<vmem>>, vector<2x8x32xf32>
    %102 = vector.shape_cast %101 : vector<2x8x32xf32> to vector<16x32xf32>
    %103 = arith.truncf %102 : vector<16x32xf32> to vector<16x32xbf16>
    %c0_40 = arith.constant 0 : index
    %c0_41 = arith.constant 0 : index
    %c0_42 = arith.constant 0 : index
    %104 = vector.load %arg4[%c0_40, %c0_41, %c0_42] : memref<1x32x32xbf16, #tpu.memory_space<vmem>>, vector<1x32x32xbf16>
    %105 = vector.shape_cast %104 : vector<1x32x32xbf16> to vector<32x32xbf16>
    %cst_43 = arith.constant dense<0.000000e+00> : vector<16x32xf32>
    %106 = tpu.matmul %103, %105, %cst_43 {dimension_numbers = #tpu.dot_dimension_numbers<[1], [0], [0], [1], [0, 0, 1, 1], [], []>} : vector<16x32xbf16>, vector<32x32xbf16>, vector<16x32xf32> -> vector<16x32xf32>
    %c0_44 = arith.constant 0 : index
    %c0_45 = arith.constant 0 : index
    %c0_46 = arith.constant 0 : index
    %107 = vector.load %arg5[%c0_44, %c0_45, %c0_46] : memref<1x1x32xf32, #tpu.memory_space<vmem>>, vector<1x1x32xf32>
    %108 = vector.shape_cast %107 : vector<1x1x32xf32> to vector<1x32xf32>
    %109 = vector.broadcast %108 : vector<1x32xf32> to vector<16x32xf32>
    %110 = arith.addf %106, %109 : vector<16x32xf32>
    %111 = arith.addf %3, %110 : vector<16x32xf32>
    %cst_47 = arith.constant dense<0.000000e+00> : vector<16xf32>
    %112 = vector.multi_reduction <add>, %111, %cst_47 [1] : vector<16x32xf32> to vector<16xf32>
    %113 = vector.shape_cast %112 : vector<16xf32> to vector<16x1xf32>
    %cst_48 = arith.constant 3.200000e+01 : f32
    %114 = vector.broadcast %cst_48 : f32 to vector<16x1xf32>
    %115 = arith.divf %113, %114 : vector<16x1xf32>
    %116 = vector.broadcast %115 : vector<16x1xf32> to vector<16x32xf32>
    %117 = arith.subf %111, %116 : vector<16x32xf32>
    %118 = arith.mulf %117, %117 : vector<16x32xf32>
    %cst_49 = arith.constant dense<0.000000e+00> : vector<16xf32>
    %119 = vector.multi_reduction <add>, %118, %cst_49 [1] : vector<16x32xf32> to vector<16xf32>
    %120 = vector.shape_cast %119 : vector<16xf32> to vector<16x1xf32>
    %cst_50 = arith.constant 3.200000e+01 : f32
    %121 = vector.broadcast %cst_50 : f32 to vector<16x1xf32>
    %122 = arith.divf %120, %121 : vector<16x1xf32>
    %123 = vector.broadcast %115 : vector<16x1xf32> to vector<16x32xf32>
    %124 = arith.subf %111, %123 : vector<16x32xf32>
    %cst_51 = arith.constant 9.99999974E-6 : f32
    %125 = vector.broadcast %cst_51 : f32 to vector<16x1xf32>
    %126 = arith.addf %122, %125 : vector<16x1xf32>
    %127 = math.rsqrt %126 : vector<16x1xf32>
    %128 = vector.broadcast %127 : vector<16x1xf32> to vector<16x32xf32>
    %129 = arith.mulf %124, %128 : vector<16x32xf32>
    %c0_52 = arith.constant 0 : index
    %c0_53 = arith.constant 0 : index
    %c0_54 = arith.constant 0 : index
    %130 = vector.load %arg6[%c0_52, %c0_53, %c0_54] : memref<1x1x32xf32, #tpu.memory_space<vmem>>, vector<1x1x32xf32>
    %131 = vector.shape_cast %130 : vector<1x1x32xf32> to vector<1x32xf32>
    %132 = vector.broadcast %131 : vector<1x32xf32> to vector<16x32xf32>
    %133 = arith.mulf %129, %132 : vector<16x32xf32>
    %c0_55 = arith.constant 0 : index
    %c0_56 = arith.constant 0 : index
    %c0_57 = arith.constant 0 : index
    %134 = vector.load %arg7[%c0_55, %c0_56, %c0_57] : memref<1x1x32xf32, #tpu.memory_space<vmem>>, vector<1x1x32xf32>
    %135 = vector.shape_cast %134 : vector<1x1x32xf32> to vector<1x32xf32>
    %136 = vector.broadcast %135 : vector<1x32xf32> to vector<16x32xf32>
    %137 = arith.addf %133, %136 : vector<16x32xf32>
    %138 = arith.truncf %137 : vector<16x32xf32> to vector<16x32xbf16>
    %c0_58 = arith.constant 0 : index
    %c0_59 = arith.constant 0 : index
    %c0_60 = arith.constant 0 : index
    %139 = vector.load %arg8[%c0_58, %c0_59, %c0_60] : memref<1x32x32xbf16, #tpu.memory_space<vmem>>, vector<1x32x32xbf16>
    %140 = vector.shape_cast %139 : vector<1x32x32xbf16> to vector<32x32xbf16>
    %cst_61 = arith.constant dense<0.000000e+00> : vector<16x32xf32>
    %141 = tpu.matmul %138, %140, %cst_61 {dimension_numbers = #tpu.dot_dimension_numbers<[1], [0], [0], [1], [0, 0, 1, 1], [], []>} : vector<16x32xbf16>, vector<32x32xbf16>, vector<16x32xf32> -> vector<16x32xf32>
    %c0_62 = arith.constant 0 : index
    %c0_63 = arith.constant 0 : index
    %c0_64 = arith.constant 0 : index
    %142 = vector.load %arg9[%c0_62, %c0_63, %c0_64] : memref<1x1x32xf32, #tpu.memory_space<vmem>>, vector<1x1x32xf32>
    %143 = vector.shape_cast %142 : vector<1x1x32xf32> to vector<1x32xf32>
    %144 = vector.broadcast %143 : vector<1x32xf32> to vector<16x32xf32>
    %145 = arith.addf %141, %144 : vector<16x32xf32>
    %c0_65 = arith.constant 0 : index
    %c0_66 = arith.constant 0 : index
    %c0_67 = arith.constant 0 : index
    %146 = vector.load %arg10[%c0_65, %c0_66, %c0_67] : memref<1x1x1xf32, #tpu.memory_space<vmem>>, vector<1x1x1xf32>
    %147 = vector.shape_cast %146 : vector<1x1x1xf32> to vector<1x1xf32>
    %148 = arith.negf %147 : vector<1x1xf32>
    %149 = math.exp %148 : vector<1x1xf32>
    %cst_68 = arith.constant 1.000000e+00 : f32
    %150 = vector.broadcast %cst_68 : f32 to vector<1x1xf32>
    %151 = arith.addf %150, %149 : vector<1x1xf32>
    %152 = arith.divf %150, %151 : vector<1x1xf32>
    %153 = tpu.iota {dimensions = array<i32: 1>} : vector<16x32xi32>
    %cst_69 = arith.constant 5.000000e-01 : f32
    %154 = vector.broadcast %cst_69 : f32 to vector<16x32xf32>
    %155 = arith.mulf %154, %145 : vector<16x32xf32>
    %cst_70 = arith.constant 0.707106769 : f32
    %156 = vector.broadcast %cst_70 : f32 to vector<16x32xf32>
    %157 = arith.mulf %145, %156 : vector<16x32xf32>
    %158 = math.erf %157 : vector<16x32xf32>
    %cst_71 = arith.constant 1.000000e+00 : f32
    %159 = vector.broadcast %cst_71 : f32 to vector<16x32xf32>
    %160 = arith.addf %159, %158 : vector<16x32xf32>
    %161 = arith.mulf %155, %160 : vector<16x32xf32>
    %c8_i32 = arith.constant 8 : i32
    %162 = vector.broadcast %c8_i32 : i32 to vector<16x32xi32>
    %163 = arith.cmpi slt, %153, %162 : vector<16x32xi32>
    %164 = math.sin %145 : vector<16x32xf32>
    %165 = vector.broadcast %152 : vector<1x1xf32> to vector<16x32xf32>
    %166 = arith.mulf %165, %164 : vector<16x32xf32>
    %c16_i32 = arith.constant 16 : i32
    %167 = vector.broadcast %c16_i32 : i32 to vector<16x32xi32>
    %168 = arith.cmpi slt, %153, %167 : vector<16x32xi32>
    %169 = math.cos %145 : vector<16x32xf32>
    %170 = vector.broadcast %152 : vector<1x1xf32> to vector<16x32xf32>
    %171 = arith.mulf %170, %169 : vector<16x32xf32>
    %cst_72 = arith.constant 1.000000e+00 : f32
    %172 = vector.broadcast %cst_72 : f32 to vector<1x1xf32>
    %173 = arith.subf %172, %152 : vector<1x1xf32>
    %174 = vector.broadcast %173 : vector<1x1xf32> to vector<16x32xf32>
    %175 = arith.mulf %174, %161 : vector<16x32xf32>
    %176 = arith.select %168, %171, %175 : vector<16x32xi1>, vector<16x32xf32>
    %177 = arith.select %163, %166, %176 : vector<16x32xi1>, vector<16x32xf32>
    %178 = arith.addf %137, %177 : vector<16x32xf32>
    %cst_73 = arith.constant dense<0.000000e+00> : vector<16xf32>
    %179 = vector.multi_reduction <add>, %178, %cst_73 [1] : vector<16x32xf32> to vector<16xf32>
    %180 = vector.shape_cast %179 : vector<16xf32> to vector<16x1xf32>
    %cst_74 = arith.constant 3.200000e+01 : f32
    %181 = vector.broadcast %cst_74 : f32 to vector<16x1xf32>
    %182 = arith.divf %180, %181 : vector<16x1xf32>
    %183 = vector.broadcast %182 : vector<16x1xf32> to vector<16x32xf32>
    %184 = arith.subf %178, %183 : vector<16x32xf32>
    %185 = arith.mulf %184, %184 : vector<16x32xf32>
    %cst_75 = arith.constant dense<0.000000e+00> : vector<16xf32>
    %186 = vector.multi_reduction <add>, %185, %cst_75 [1] : vector<16x32xf32> to vector<16xf32>
    %187 = vector.shape_cast %186 : vector<16xf32> to vector<16x1xf32>
    %cst_76 = arith.constant 3.200000e+01 : f32
    %188 = vector.broadcast %cst_76 : f32 to vector<16x1xf32>
    %189 = arith.divf %187, %188 : vector<16x1xf32>
    %190 = vector.broadcast %182 : vector<16x1xf32> to vector<16x32xf32>
    %191 = arith.subf %178, %190 : vector<16x32xf32>
    %cst_77 = arith.constant 9.99999974E-6 : f32
    %192 = vector.broadcast %cst_77 : f32 to vector<16x1xf32>
    %193 = arith.addf %189, %192 : vector<16x1xf32>
    %194 = math.rsqrt %193 : vector<16x1xf32>
    %195 = vector.broadcast %194 : vector<16x1xf32> to vector<16x32xf32>
    %196 = arith.mulf %191, %195 : vector<16x32xf32>
    %c0_78 = arith.constant 0 : index
    %c0_79 = arith.constant 0 : index
    %c0_80 = arith.constant 0 : index
    %197 = vector.load %arg11[%c0_78, %c0_79, %c0_80] : memref<1x1x32xf32, #tpu.memory_space<vmem>>, vector<1x1x32xf32>
    %198 = vector.shape_cast %197 : vector<1x1x32xf32> to vector<1x32xf32>
    %199 = vector.broadcast %198 : vector<1x32xf32> to vector<16x32xf32>
    %200 = arith.mulf %196, %199 : vector<16x32xf32>
    %c0_81 = arith.constant 0 : index
    %c0_82 = arith.constant 0 : index
    %c0_83 = arith.constant 0 : index
    %201 = vector.load %arg12[%c0_81, %c0_82, %c0_83] : memref<1x1x32xf32, #tpu.memory_space<vmem>>, vector<1x1x32xf32>
    %202 = vector.shape_cast %201 : vector<1x1x32xf32> to vector<1x32xf32>
    %203 = vector.broadcast %202 : vector<1x32xf32> to vector<16x32xf32>
    %204 = arith.addf %200, %203 : vector<16x32xf32>
    %c0_84 = arith.constant 0 : index
    %c0_85 = arith.constant 0 : index
    %205 = vector.load %arg13[%c0_84, %c0_85] : memref<16x32xf32, #tpu.memory_space<vmem>>, vector<16x32xf32>
    tpu.vector_store %arg13[%c0_84, %c0_85], %204 {strides = array<i32>} : memref<16x32xf32, #tpu.memory_space<vmem>>, vector<16x32xf32>,
    return
  }
  func.func @transform_0(%arg0: i32) -> (i32, i32) {
    %c0_i32 = arith.constant 0 : i32
    %c0_i32_0 = arith.constant 0 : i32
    %c0_i32_1 = arith.constant 0 : i32
    return %c0_i32, %c0_i32_0 : i32, i32
  }
  func.func @transform_1(%arg0: i32) -> (i32, i32, i32) {
    %c0_i32 = arith.constant 0 : i32
    %c0_i32_0 = arith.constant 0 : i32
    %c0_i32_1 = arith.constant 0 : i32
    return %arg0, %c0_i32, %c0_i32_0 : i32, i32, i32
  }
  func.func @transform_2(%arg0: i32) -> (i32, i32, i32) {
    %c0_i32 = arith.constant 0 : i32
    %c0_i32_0 = arith.constant 0 : i32
    %c0_i32_1 = arith.constant 0 : i32
    return %arg0, %c0_i32, %c0_i32_0 : i32, i32, i32
  }
  func.func @transform_3(%arg0: i32) -> (i32, i32, i32) {
    %c0_i32 = arith.constant 0 : i32
    %c0_i32_0 = arith.constant 0 : i32
    %c0_i32_1 = arith.constant 0 : i32
    return %arg0, %c0_i32, %c0_i32_0 : i32, i32, i32
  }
  func.func @transform_4(%arg0: i32) -> (i32, i32, i32) {
    %c0_i32 = arith.constant 0 : i32
    %c0_i32_0 = arith.constant 0 : i32
    %c0_i32_1 = arith.constant 0 : i32
    return %arg0, %c0_i32, %c0_i32_0 : i32, i32, i32
  }
  func.func @transform_5(%arg0: i32) -> (i32, i32, i32) {
    %c0_i32 = arith.constant 0 : i32
    %c0_i32_0 = arith.constant 0 : i32
    %c0_i32_1 = arith.constant 0 : i32
    return %arg0, %c0_i32, %c0_i32_0 : i32, i32, i32
  }
  func.func @transform_6(%arg0: i32) -> (i32, i32, i32) {
    %c0_i32 = arith.constant 0 : i32
    %c0_i32_0 = arith.constant 0 : i32
    %c0_i32_1 = arith.constant 0 : i32
    return %arg0, %c0_i32, %c0_i32_0 : i32, i32, i32
  }
  func.func @transform_7(%arg0: i32) -> (i32, i32, i32) {
    %c0_i32 = arith.constant 0 : i32
    %c0_i32_0 = arith.constant 0 : i32
    %c0_i32_1 = arith.constant 0 : i32
    return %arg0, %c0_i32, %c0_i32_0 : i32, i32, i32
  }
  func.func @transform_8(%arg0: i32) -> (i32, i32, i32) {
    %c0_i32 = arith.constant 0 : i32
    %c0_i32_0 = arith.constant 0 : i32
    %c0_i32_1 = arith.constant 0 : i32
    return %arg0, %c0_i32, %c0_i32_0 : i32, i32, i32
  }
  func.func @transform_9(%arg0: i32) -> (i32, i32, i32) {
    %c0_i32 = arith.constant 0 : i32
    %c0_i32_0 = arith.constant 0 : i32
    %c0_i32_1 = arith.constant 0 : i32
    return %arg0, %c0_i32, %c0_i32_0 : i32, i32, i32
  }
  func.func @transform_10(%arg0: i32) -> (i32, i32, i32) {
    %c0_i32 = arith.constant 0 : i32
    %c0_i32_0 = arith.constant 0 : i32
    %c0_i32_1 = arith.constant 0 : i32
    return %arg0, %c0_i32, %c0_i32_0 : i32, i32, i32
  }
  func.func @transform_11(%arg0: i32) -> (i32, i32, i32) {
    %c0_i32 = arith.constant 0 : i32
    %c0_i32_0 = arith.constant 0 : i32
    %c0_i32_1 = arith.constant 0 : i32
    return %arg0, %c0_i32, %c0_i32_0 : i32, i32, i32
  }
  func.func @transform_12(%arg0: i32) -> (i32, i32) {
    %c0_i32 = arith.constant 0 : i32
    %c0_i32_0 = arith.constant 0 : i32
    %c0_i32_1 = arith.constant 0 : i32
    return %c0_i32, %c0_i32_0 : i32, i32
  }
}

</mosaic_0001>

<llo_original>
// kernel: tpu_custom_call.1
$region0: #{tpu_custom_call.1}
  #allocation0 [shape = 'u32[]', space=smem, size = 0x4, offset = 0x4, fixed_abs, tag = 'smem constant byte address 0x4 - core index']
  #allocation1 [shape = 'u32[144,128]{1,0:T(1,128)}', space=vmem, size = 0x12000, scoped, tag = 'internal scratch']
  #allocation2 [shape = 'f32[2,8,32]{2,1,0:T(8,128)}', space=vmem, size = 0x2000, scoped, tag = 'scratch operand']
  %s0 = inlined_call_operand.hbm [shape: f32[16,32], index: 0, kind: input, shape index: {}]
  %s1 = inlined_call_operand.hbm [shape: bf16[2,32,96], index: 1, kind: input, shape index: {}]
  %s2 = inlined_call_operand.vmem [shape: f32[2,1,96], index: 2, kind: input, shape index: {}]
  %s3 = inlined_call_operand.hbm [shape: bf16[2,32,32], index: 3, kind: input, shape index: {}]
  %s4 = inlined_call_operand.vmem [shape: f32[2,1,32], index: 4, kind: input, shape index: {}]
  %s5 = inlined_call_operand.vmem [shape: f32[2,1,32], index: 5, kind: input, shape index: {}]
  %s6 = inlined_call_operand.vmem [shape: f32[2,1,32], index: 6, kind: input, shape index: {}]
  %s7 = inlined_call_operand.hbm [shape: bf16[2,32,32], index: 7, kind: input, shape index: {}]
  %s8 = inlined_call_operand.vmem [shape: f32[2,1,32], index: 8, kind: input, shape index: {}]
  %s9 = inlined_call_operand.vmem [shape: f32[2,1,1], index: 9, kind: input, shape index: {}]
  %s10 = inlined_call_operand.vmem [shape: f32[2,1,32], index: 10, kind: input, shape index: {}]
  %s11 = inlined_call_operand.vmem [shape: f32[2,1,32], index: 11, kind: input, shape index: {}]
  %s12 = inlined_call_operand.hbm [shape: f32[16,32], index: 12, kind: output, shape index: {}]
  %s13 = sld [smem:[#allocation0]]
  $region101: #{tpu_custom_call.1} parent=0
    _
  %s15 = ssub.s32 1, %s13
  %s16 = scalar_select 0, %s15, %s13
  $region1: #{tpu_custom_call.1} parent=0
    #allocation3 [shape = 'u8[8192]{0}', space=vmem, size = 0x2000, scoped, tag = 'input window, operand 0, single buffered']
    #allocation4 [shape = 's32[2]{0}', space=sflag, size = 0x8, scoped, tag = 'scoped memory for tpu_custom_call.1']
    #allocation5 [shape = 's32[2]{0}', space=sflag, size = 0x8, scoped, tag = 'scoped memory for tpu_custom_call.1']
    #allocation6 [shape = 'u8[16384]{0}', space=vmem, size = 0x4000, scoped, tag = 'input window, operand 1']
    #allocation7 [shape = 's32[2]{0}', space=sflag, size = 0x8, scoped, tag = 'scoped memory for tpu_custom_call.1']
    #allocation8 [shape = 'u8[16384]{0}', space=vmem, size = 0x4000, scoped, tag = 'input window, operand 3']
    #allocation9 [shape = 'u8[16384]{0}', space=vmem, size = 0x4000, scoped, tag = 'input window, operand 7']
    #allocation10 [shape = 's32[2]{0}', space=sflag, size = 0x8, scoped, tag = 'scoped memory for tpu_custom_call.1']
    #allocation11 [shape = 'u8[8192]{0}', space=vmem, size = 0x2000, scoped, tag = 'output window, operand 0, single buffered']
    %17 = vsyncpa [#allocation4], 0
    %18 = vsyncpa [#allocation7], 0
    %s19 = scalar_lea.sflag [#allocation7], 1
    %20 = vsyncpa %s19, 0
    %21 = vsyncpa [#allocation10], 0
    %s22 = scalar_lea.sflag [#allocation10], 1
    %23 = vsyncpa %s22, 0
    %24 = vsyncpa [#allocation5], 0
    loop: start=0, step=1, limit=4
    $region2: #{tpu_custom_call.1} parent=1 // loop_pre_header
      _
    $region3: #{tpu_custom_call.1} parent=1 // loop_header
      %s26 = sphi 0, %s30
      %p27 = scmp.ge.s32.totalorder %s26, 4
      %s34 = sphi 0, %s34
      %s36 = sphi 0, %s34
      %s37 = sphi 0, %s36
      %s51 = sphi 0, %s37
      %s57 = sphi 0, %s59
      %s60 = sphi 0, %s57
      %s61 = sphi 0, %s60
      %s77 = sphi 0, %s61
      %s83 = sphi 0, %s85
      %s86 = sphi 0, %s83
      %s87 = sphi 0, %s86
      %s103 = sphi 0, %s87
      %s109 = sphi 0, %s111
      %s112 = sphi 0, %s109
      %s113 = sphi 0, %s112
      %s129 = sphi 0, %s113
      %s135 = sphi 0, %s137
      %s138 = sphi 0, %s135
      %s139 = sphi 0, %s138
      %s155 = sphi 0, %s139
      %s161 = sphi 0, %s163
      %s164 = sphi 0, %s161
      %s165 = sphi 0, %s164
      %s181 = sphi 0, %s165
      %s187 = sphi 0, %s189
      %s190 = sphi 0, %s187
      %s191 = sphi 0, %s190
      %s207 = sphi 0, %s191
      %s213 = sphi 0, %s215
      %s216 = sphi 0, %s213
      %s217 = sphi 0, %s216
      %s233 = sphi 0, %s217
      %s239 = sphi 0, %s241
      %s242 = sphi 0, %s239
      %s243 = sphi 0, %s242
      %s259 = sphi 0, %s243
      %s265 = sphi 0, %s267
      %s268 = sphi 0, %s265
      %s269 = sphi 0, %s268
      %s285 = sphi 0, %s269
      %s291 = sphi 0, %s293
      %s294 = sphi 0, %s291
      %s295 = sphi 0, %s294
      %s311 = sphi 0, %s295
      %s317 = sphi 0, %s319
      %s320 = sphi 0, %s317
      %s321 = sphi 0, %s320
      %s337 = sphi 0, %s321
      %s341 = sphi 0, %s341
      %s343 = sphi 0, %s341
      %s344 = sphi 0, %s343
      %s358 = sphi 0, %s344
    $region4: #{tpu_custom_call.1} parent=1 // loop_header_branch
      %29 = sbr.rel (%p27) target = $region8
    $region5: #{tpu_custom_call.1} parent=1 // loop_body
      %s31 = ssub.s32 %s26, 1
      %s32 = ssub.s32 %s26, 2
      %s33 = sadd.s32 %s26, 1
      %s35 = sadd.s32 %s34, 1
      %p38 = scmp.eq.s32.totalorder %s26, 1
      %p39 = scmp.ne.s32.totalorder %s34, %s36
      %p40 = scmp.eq.s32.totalorder %s26, 0
      %p41 = por %p39, %p40
      %p42 = scmp.ne.s32.totalorder %s34, %s36
      %p43 = scmp.eq.s32.totalorder %s31, 1
      %p44 = por %p42, %p43
      %p45 = scmp.ne.s32.totalorder %s36, %s37
      %p46 = scmp.eq.s32.totalorder %s31, 0
      %p47 = por %p45, %p46
      %p48 = scmp.ne.s32.totalorder %s36, %s37
      %p49 = scmp.eq.s32.totalorder %s32, 1
      %p50 = por %p48, %p49
      %p52 = scmp.ne.s32.totalorder %s37, %s51
      %p53 = scmp.eq.s32.totalorder %s32, 0
      %p54 = por %p52, %p53
      %s55 = ssub.s32 %s26, %s33
      %p56 = scmp.eq.s32.totalorder %s55, 0
      %s58 = sadd.s32 %s57, 1
      %s59 = scalar_select %p56, %s57, %s58
      %p62 = pneg %p56
      %p63 = scmp.eq.s32.totalorder %s26, 1
      %p64 = por %p62, %p63
      %p65 = scmp.ne.s32.totalorder %s57, %s60
      %p66 = scmp.eq.s32.totalorder %s26, 0
      %p67 = por %p65, %p66
      %p68 = scmp.ne.s32.totalorder %s57, %s60
      %p69 = scmp.eq.s32.totalorder %s31, 1
      %p70 = por %p68, %p69
      %p71 = scmp.ne.s32.totalorder %s60, %s61
      %p72 = scmp.eq.s32.totalorder %s31, 0
      %p73 = por %p71, %p72
      %p74 = scmp.ne.s32.totalorder %s60, %s61
      %p75 = scmp.eq.s32.totalorder %s32, 1
      %p76 = por %p74, %p75
      %p78 = scmp.ne.s32.totalorder %s61, %s77
      %p79 = scmp.eq.s32.totalorder %s32, 0
      %p80 = por %p78, %p79
      %s81 = ssub.s32 %s26, %s33
      %p82 = scmp.eq.s32.totalorder %s81, 0
      %s84 = sadd.s32 %s83, 1
      %s85 = scalar_select %p82, %s83, %s84
      %p88 = pneg %p82
      %p89 = scmp.eq.s32.totalorder %s26, 1
      %p90 = por %p88, %p89
      %p91 = scmp.ne.s32.totalorder %s83, %s86
      %p92 = scmp.eq.s32.totalorder %s26, 0
      %p93 = por %p91, %p92
      %p94 = scmp.ne.s32.totalorder %s83, %s86
      %p95 = scmp.eq.s32.totalorder %s31, 1
      %p96 = por %p94, %p95
      %p97 = scmp.ne.s32.totalorder %s86, %s87
      %p98 = scmp.eq.s32.totalorder %s31, 0
      %p99 = por %p97, %p98
      %p100 = scmp.ne.s32.totalorder %s86, %s87
      %p101 = scmp.eq.s32.totalorder %s32, 1
      %p102 = por %p100, %p101
      %p104 = scmp.ne.s32.totalorder %s87, %s103
      %p105 = scmp.eq.s32.totalorder %s32, 0
      %p106 = por %p104, %p105
      %s107 = ssub.s32 %s26, %s33
      %p108 = scmp.eq.s32.totalorder %s107, 0
      %s110 = sadd.s32 %s109, 1
      %s111 = scalar_select %p108, %s109, %s110
      %p114 = pneg %p108
      %p115 = scmp.eq.s32.totalorder %s26, 1
      %p116 = por %p114, %p115
      %p117 = scmp.ne.s32.totalorder %s109, %s112
      %p118 = scmp.eq.s32.totalorder %s26, 0
      %p119 = por %p117, %p118
      %p120 = scmp.ne.s32.totalorder %s109, %s112
      %p121 = scmp.eq.s32.totalorder %s31, 1
      %p122 = por %p120, %p121
      %p123 = scmp.ne.s32.totalorder %s112, %s113
      %p124 = scmp.eq.s32.totalorder %s31, 0
      %p125 = por %p123, %p124
      %p126 = scmp.ne.s32.totalorder %s112, %s113
      %p127 = scmp.eq.s32.totalorder %s32, 1
      %p128 = por %p126, %p127
      %p130 = scmp.ne.s32.totalorder %s113, %s129
      %p131 = scmp.eq.s32.totalorder %s32, 0
      %p132 = por %p130, %p131
      %s133 = ssub.s32 %s26, %s33
      %p134 = scmp.eq.s32.totalorder %s133, 0
      %s136 = sadd.s32 %s135, 1
      %s137 = scalar_select %p134, %s135, %s136
      %p140 = pneg %p134
      %p141 = scmp.eq.s32.totalorder %s26, 1
      %p142 = por %p140, %p141
      %p143 = scmp.ne.s32.totalorder %s135, %s138
      %p144 = scmp.eq.s32.totalorder %s26, 0
      %p145 = por %p143, %p144
      %p146 = scmp.ne.s32.totalorder %s135, %s138
      %p147 = scmp.eq.s32.totalorder %s31, 1
      %p148 = por %p146, %p147
      %p149 = scmp.ne.s32.totalorder %s138, %s139
      %p150 = scmp.eq.s32.totalorder %s31, 0
      %p151 = por %p149, %p150
      %p152 = scmp.ne.s32.totalorder %s138, %s139
      %p153 = scmp.eq.s32.totalorder %s32, 1
      %p154 = por %p152, %p153
      %p156 = scmp.ne.s32.totalorder %s139, %s155
      %p157 = scmp.eq.s32.totalorder %s32, 0
      %p158 = por %p156, %p157
      %s159 = ssub.s32 %s26, %s33
      %p160 = scmp.eq.s32.totalorder %s159, 0
      %s162 = sadd.s32 %s161, 1
      %s163 = scalar_select %p160, %s161, %s162
      %p166 = pneg %p160
      %p167 = scmp.eq.s32.totalorder %s26, 1
      %p168 = por %p166, %p167
      %p169 = scmp.ne.s32.totalorder %s161, %s164
      %p170 = scmp.eq.s32.totalorder %s26, 0
      %p171 = por %p169, %p170
      %p172 = scmp.ne.s32.totalorder %s161, %s164
      %p173 = scmp.eq.s32.totalorder %s31, 1
      %p174 = por %p172, %p173
      %p175 = scmp.ne.s32.totalorder %s164, %s165
      %p176 = scmp.eq.s32.totalorder %s31, 0
      %p177 = por %p175, %p176
      %p178 = scmp.ne.s32.totalorder %s164, %s165
      %p179 = scmp.eq.s32.totalorder %s32, 1
      %p180 = por %p178, %p179
      %p182 = scmp.ne.s32.totalorder %s165, %s181
      %p183 = scmp.eq.s32.totalorder %s32, 0
      %p184 = por %p182, %p183
      %s185 = ssub.s32 %s26, %s33
      %p186 = scmp.eq.s32.totalorder %s185, 0
      %s188 = sadd.s32 %s187, 1
      %s189 = scalar_select %p186, %s187, %s188
      %p192 = pneg %p186
      %p193 = scmp.eq.s32.totalorder %s26, 1
      %p194 = por %p192, %p193
      %p195 = scmp.ne.s32.totalorder %s187, %s190
      %p196 = scmp.eq.s32.totalorder %s26, 0
      %p197 = por %p195, %p196
      %p198 = scmp.ne.s32.totalorder %s187, %s190
      %p199 = scmp.eq.s32.totalorder %s31, 1
      %p200 = por %p198, %p199
      %p201 = scmp.ne.s32.totalorder %s190, %s191
      %p202 = scmp.eq.s32.totalorder %s31, 0
      %p203 = por %p201, %p202
      %p204 = scmp.ne.s32.totalorder %s190, %s191
      %p205 = scmp.eq.s32.totalorder %s32, 1
      %p206 = por %p204, %p205
      %p208 = scmp.ne.s32.totalorder %s191, %s207
      %p209 = scmp.eq.s32.totalorder %s32, 0
      %p210 = por %p208, %p209
      %s211 = ssub.s32 %s26, %s33
      %p212 = scmp.eq.s32.totalorder %s211, 0
      %s214 = sadd.s32 %s213, 1
      %s215 = scalar_select %p212, %s213, %s214
      %p218 = pneg %p212
      %p219 = scmp.eq.s32.totalorder %s26, 1
      %p220 = por %p218, %p219
      %p221 = scmp.ne.s32.totalorder %s213, %s216
      %p222 = scmp.eq.s32.totalorder %s26, 0
      %p223 = por %p221, %p222
      %p224 = scmp.ne.s32.totalorder %s213, %s216
      %p225 = scmp.eq.s32.totalorder %s31, 1
      %p226 = por %p224, %p225
      %p227 = scmp.ne.s32.totalorder %s216, %s217
      %p228 = scmp.eq.s32.totalorder %s31, 0
      %p229 = por %p227, %p228
      %p230 = scmp.ne.s32.totalorder %s216, %s217
      %p231 = scmp.eq.s32.totalorder %s32, 1
      %p232 = por %p230, %p231
      %p234 = scmp.ne.s32.totalorder %s217, %s233
      %p235 = scmp.eq.s32.totalorder %s32, 0
      %p236 = por %p234, %p235
      %s237 = ssub.s32 %s26, %s33
      %p238 = scmp.eq.s32.totalorder %s237, 0
      %s240 = sadd.s32 %s239, 1
      %s241 = scalar_select %p238, %s239, %s240
      %p244 = pneg %p238
      %p245 = scmp.eq.s32.totalorder %s26, 1
      %p246 = por %p244, %p245
      %p247 = scmp.ne.s32.totalorder %s239, %s242
      %p248 = scmp.eq.s32.totalorder %s26, 0
      %p249 = por %p247, %p248
      %p250 = scmp.ne.s32.totalorder %s239, %s242
      %p251 = scmp.eq.s32.totalorder %s31, 1
      %p252 = por %p250, %p251
      %p253 = scmp.ne.s32.totalorder %s242, %s243
      %p254 = scmp.eq.s32.totalorder %s31, 0
      %p255 = por %p253, %p254
      %p256 = scmp.ne.s32.totalorder %s242, %s243
      %p257 = scmp.eq.s32.totalorder %s32, 1
      %p258 = por %p256, %p257
      %p260 = scmp.ne.s32.totalorder %s243, %s259
      %p261 = scmp.eq.s32.totalorder %s32, 0
      %p262 = por %p260, %p261
      %s263 = ssub.s32 %s26, %s33
      %p264 = scmp.eq.s32.totalorder %s263, 0
      %s266 = sadd.s32 %s265, 1
      %s267 = scalar_select %p264, %s265, %s266
      %p270 = pneg %p264
      %p271 = scmp.eq.s32.totalorder %s26, 1
      %p272 = por %p270, %p271
      %p273 = scmp.ne.s32.totalorder %s265, %s268
      %p274 = scmp.eq.s32.totalorder %s26, 0
      %p275 = por %p273, %p274
      %p276 = scmp.ne.s32.totalorder %s265, %s268
      %p277 = scmp.eq.s32.totalorder %s31, 1
      %p278 = por %p276, %p277
      %p279 = scmp.ne.s32.totalorder %s268, %s269
      %p280 = scmp.eq.s32.totalorder %s31, 0
      %p281 = por %p279, %p280
      %p282 = scmp.ne.s32.totalorder %s268, %s269
      %p283 = scmp.eq.s32.totalorder %s32, 1
      %p284 = por %p282, %p283
      %p286 = scmp.ne.s32.totalorder %s269, %s285
      %p287 = scmp.eq.s32.totalorder %s32, 0
      %p288 = por %p286, %p287
      %s289 = ssub.s32 %s26, %s33
      %p290 = scmp.eq.s32.totalorder %s289, 0
      %s292 = sadd.s32 %s291, 1
      %s293 = scalar_select %p290, %s291, %s292
      %p296 = pneg %p290
      %p297 = scmp.eq.s32.totalorder %s26, 1
      %p298 = por %p296, %p297
      %p299 = scmp.ne.s32.totalorder %s291, %s294
      %p300 = scmp.eq.s32.totalorder %s26, 0
      %p301 = por %p299, %p300
      %p302 = scmp.ne.s32.totalorder %s291, %s294
      %p303 = scmp.eq.s32.totalorder %s31, 1
      %p304 = por %p302, %p303
      %p305 = scmp.ne.s32.totalorder %s294, %s295
      %p306 = scmp.eq.s32.totalorder %s31, 0
      %p307 = por %p305, %p306
      %p308 = scmp.ne.s32.totalorder %s294, %s295
      %p309 = scmp.eq.s32.totalorder %s32, 1
      %p310 = por %p308, %p309
      %p312 = scmp.ne.s32.totalorder %s295, %s311
      %p313 = scmp.eq.s32.totalorder %s32, 0
      %p314 = por %p312, %p313
      %s315 = ssub.s32 %s26, %s33
      %p316 = scmp.eq.s32.totalorder %s315, 0
      %s318 = sadd.s32 %s317, 1
      %s319 = scalar_select %p316, %s317, %s318
      %p322 = pneg %p316
      %p323 = scmp.eq.s32.totalorder %s26, 1
      %p324 = por %p322, %p323
      %p325 = scmp.ne.s32.totalorder %s317, %s320
      %p326 = scmp.eq.s32.totalorder %s26, 0
      %p327 = por %p325, %p326
      %p328 = scmp.ne.s32.totalorder %s317, %s320
      %p329 = scmp.eq.s32.totalorder %s31, 1
      %p330 = por %p328, %p329
      %p331 = scmp.ne.s32.totalorder %s320, %s321
      %p332 = scmp.eq.s32.totalorder %s31, 0
      %p333 = por %p331, %p332
      %p334 = scmp.ne.s32.totalorder %s320, %s321
      %p335 = scmp.eq.s32.totalorder %s32, 1
      %p336 = por %p334, %p335
      %p338 = scmp.ne.s32.totalorder %s321, %s337
      %p339 = scmp.eq.s32.totalorder %s32, 0
      %p340 = por %p338, %p339
      %s342 = sadd.s32 %s341, 1
      %p345 = scmp.eq.s32.totalorder %s26, 1
      %p346 = scmp.ne.s32.totalorder %s341, %s343
      %p347 = scmp.eq.s32.totalorder %s26, 0
      %p348 = por %p346, %p347
      %p349 = scmp.ne.s32.totalorder %s341, %s343
      %p350 = scmp.eq.s32.totalorder %s31, 1
      %p351 = por %p349, %p350
      %p352 = scmp.ne.s32.totalorder %s343, %s344
      %p353 = scmp.eq.s32.totalorder %s31, 0
      %p354 = por %p352, %p353
      %p355 = scmp.ne.s32.totalorder %s343, %s344
      %p356 = scmp.eq.s32.totalorder %s32, 1
      %p357 = por %p355, %p356
      %p359 = scmp.ne.s32.totalorder %s344, %s358
      %p360 = scmp.eq.s32.totalorder %s32, 0
      %p361 = por %p359, %p360
      %p362 = scmp.le.s32.totalorder 1, %s26
      %p363 = scmp.lt.s32.totalorder %s26, 3
      %p364 = pnand %p362, %p363
      %p365 = pneg %p364
      // Predicated region
      $region9: #{tpu_custom_call.1} parent=5 // pred_check
        _
      $region10: #{tpu_custom_call.1} parent=5 // pred_check_branch
        %367 = sbr.rel (%p364) target = $region12
      $region11: #{tpu_custom_call.1} parent=5 // pred_region
        %s368 = ssub.s32 %s26, 1
        // Predicated region
        $region13: #{tpu_custom_call.1} parent=11 // pred_check
          %p369 = pneg %p47
        $region14: #{tpu_custom_call.1} parent=11 // pred_check_branch
          %371 = sbr.rel (%p369) target = $region16
        $region15: #{tpu_custom_call.1} parent=11 // pred_region
          %s373 = ssub.s32 256, 256
          %374 = vsyncadd [#allocation4], %s373
          %s375 = sshll.u32 [#allocation3], 4
          %s376 = int_to_ptr.vmem [resolvable:$true] %s375
          %381 = dma.hbm_to_vmem [thread:$0]  %s0, 256, %s376, [#allocation4], 128, 128, 8
        $region16: #{tpu_custom_call.1} parent=11 // pred_fallthru
          _
      $region12: #{tpu_custom_call.1} parent=5 // pred_fallthru
        _
      %p382 = scmp.lt.s32.totalorder %s26, 2
      // Predicated region
      $region17: #{tpu_custom_call.1} parent=5 // pred_check
        %p383 = pneg %p382
      $region18: #{tpu_custom_call.1} parent=5 // pred_check_branch
        %385 = sbr.rel (%p383) target = $region20
      $region19: #{tpu_custom_call.1} parent=5 // pred_region
        // Predicated region
        $region21: #{tpu_custom_call.1} parent=19 // pred_check
          %p386 = pneg %p67
        $region22: #{tpu_custom_call.1} parent=19 // pred_check_branch
          %388 = sbr.rel (%p386) target = $region24
        $region23: #{tpu_custom_call.1} parent=19 // pred_region
          %s389 = sand.u32 %s26, 1
          %s390 = scalar_lea.sflag [#allocation7], %s389
          %s391 = sand.u32 %s57, 1
          %s392 = smul.addr %s391, 16
          %s393 = scalar_lea.vmem [#allocation6], %s392
          %s395 = ssub.s32 256, 256
          %396 = vsyncadd %s390, %s395
          %s397 = smul.addr %s26, 4
          %s398 = smul.addr %s397, 64
          %s399 = scalar_lea.hbm %s1, %s398
          %s400 = sshll.u32 %s393, 4
          %s401 = int_to_ptr.vmem [resolvable:$true] %s400
          %406 = dma.hbm_to_vmem [thread:$0]  %s399, 256, %s401, %s390, 64, 64, 4
        $region24: #{tpu_custom_call.1} parent=19 // pred_fallthru
          _
        // Predicated region
        $region25: #{tpu_custom_call.1} parent=19 // pred_check
          %p407 = pneg %p93
        $region26: #{tpu_custom_call.1} parent=19 // pred_check_branch
          %409 = sbr.rel (%p407) target = $region28
        $region27: #{tpu_custom_call.1} parent=19 // pred_region
          %p410 = scmp.lt.s32.totalorder %s26, 1
          %s411 = scalar_select %p410, %s26, 1
          %s412 = scalar_lea.vmem %s2, %s411
        $region28: #{tpu_custom_call.1} parent=19 // pred_fallthru
          _
        // Predicated region
        $region29: #{tpu_custom_call.1} parent=19 // pred_check
          %p413 = pneg %p119
        $region30: #{tpu_custom_call.1} parent=19 // pred_check_branch
          %415 = sbr.rel (%p413) target = $region32
        $region31: #{tpu_custom_call.1} parent=19 // pred_region
          %s416 = sand.u32 %s26, 1
          %s417 = scalar_lea.sflag [#allocation7], %s416
          %s418 = sand.u32 %s109, 1
          %s419 = smul.addr %s418, 16
          %s420 = scalar_lea.vmem [#allocation8], %s419
          %s422 = ssub.s32 256, 256
          %423 = vsyncadd %s417, %s422
          %s424 = smul.addr %s26, 4
          %s425 = smul.addr %s424, 64
          %s426 = scalar_lea.hbm %s3, %s425
          %s427 = sshll.u32 %s420, 4
          %s428 = int_to_ptr.vmem [resolvable:$true] %s427
          %433 = dma.hbm_to_vmem [thread:$0]  %s426, 256, %s428, %s417, 64, 64, 4
        $region32: #{tpu_custom_call.1} parent=19 // pred_fallthru
          _
        // Predicated region
        $region33: #{tpu_custom_call.1} parent=19 // pred_check
          %p434 = pneg %p145
        $region34: #{tpu_custom_call.1} parent=19 // pred_check_branch
          %436 = sbr.rel (%p434) target = $region36
        $region35: #{tpu_custom_call.1} parent=19 // pred_region
          %p437 = scmp.lt.s32.totalorder %s26, 1
          %s438 = scalar_select %p437, %s26, 1
          %s439 = scalar_lea.vmem %s4, %s438
        $region36: #{tpu_custom_call.1} parent=19 // pred_fallthru
          _
        // Predicated region
        $region37: #{tpu_custom_call.1} parent=19 // pred_check
          %p440 = pneg %p171
        $region38: #{tpu_custom_call.1} parent=19 // pred_check_branch
          %442 = sbr.rel (%p440) target = $region40
        $region39: #{tpu_custom_call.1} parent=19 // pred_region
          %p443 = scmp.lt.s32.totalorder %s26, 1
          %s444 = scalar_select %p443, %s26, 1
          %s445 = scalar_lea.vmem %s5, %s444
        $region40: #{tpu_custom_call.1} parent=19 // pred_fallthru
          _
        // Predicated region
        $region41: #{tpu_custom_call.1} parent=19 // pred_check
          %p446 = pneg %p197
        $region42: #{tpu_custom_call.1} parent=19 // pred_check_branch
          %448 = sbr.rel (%p446) target = $region44
        $region43: #{tpu_custom_call.1} parent=19 // pred_region
          %p449 = scmp.lt.s32.totalorder %s26, 1
          %s450 = scalar_select %p449, %s26, 1
          %s451 = scalar_lea.vmem %s6, %s450
        $region44: #{tpu_custom_call.1} parent=19 // pred_fallthru
          _
        // Predicated region
        $region45: #{tpu_custom_call.1} parent=19 // pred_check
          %p452 = pneg %p223
        $region46: #{tpu_custom_call.1} parent=19 // pred_check_branch
          %454 = sbr.rel (%p452) target = $region48
        $region47: #{tpu_custom_call.1} parent=19 // pred_region
          %s455 = sand.u32 %s213, 1
          %s456 = scalar_lea.sflag [#allocation10], %s455
          %s457 = sand.u32 %s213, 1
          %s458 = smul.addr %s457, 16
          %s459 = scalar_lea.vmem [#allocation9], %s458
          %s461 = ssub.s32 256, 256
          %462 = vsyncadd %s456, %s461
          %s463 = smul.addr %s26, 4
          %s464 = smul.addr %s463, 64
          %s465 = scalar_lea.hbm %s7, %s464
          %s466 = sshll.u32 %s459, 4
          %s467 = int_to_ptr.vmem [resolvable:$true] %s466
          %472 = dma.hbm_to_vmem [thread:$0]  %s465, 256, %s467, %s456, 64, 64, 4
        $region48: #{tpu_custom_call.1} parent=19 // pred_fallthru
          _
        // Predicated region
        $region49: #{tpu_custom_call.1} parent=19 // pred_check
          %p473 = pneg %p249
        $region50: #{tpu_custom_call.1} parent=19 // pred_check_branch
          %475 = sbr.rel (%p473) target = $region52
        $region51: #{tpu_custom_call.1} parent=19 // pred_region
          %p476 = scmp.lt.s32.totalorder %s26, 1
          %s477 = scalar_select %p476, %s26, 1
          %s478 = scalar_lea.vmem %s8, %s477
        $region52: #{tpu_custom_call.1} parent=19 // pred_fallthru
          _
        // Predicated region
        $region53: #{tpu_custom_call.1} parent=19 // pred_check
          %p479 = pneg %p275
        $region54: #{tpu_custom_call.1} parent=19 // pred_check_branch
          %481 = sbr.rel (%p479) target = $region56
        $region55: #{tpu_custom_call.1} parent=19 // pred_region
          %p482 = scmp.lt.s32.totalorder %s26, 1
          %s483 = scalar_select %p482, %s26, 1
          %s484 = scalar_lea.vmem %s9, %s483
        $region56: #{tpu_custom_call.1} parent=19 // pred_fallthru
          _
        // Predicated region
        $region57: #{tpu_custom_call.1} parent=19 // pred_check
          %p485 = pneg %p301
        $region58: #{tpu_custom_call.1} parent=19 // pred_check_branch
          %487 = sbr.rel (%p485) target = $region60
        $region59: #{tpu_custom_call.1} parent=19 // pred_region
          %p488 = scmp.lt.s32.totalorder %s26, 1
          %s489 = scalar_select %p488, %s26, 1
          %s490 = scalar_lea.vmem %s10, %s489
        $region60: #{tpu_custom_call.1} parent=19 // pred_fallthru
          _
        // Predicated region
        $region61: #{tpu_custom_call.1} parent=19 // pred_check
          %p491 = pneg %p327
        $region62: #{tpu_custom_call.1} parent=19 // pred_check_branch
          %493 = sbr.rel (%p491) target = $region64
        $region63: #{tpu_custom_call.1} parent=19 // pred_region
          %p494 = scmp.lt.s32.totalorder %s26, 1
          %s495 = scalar_select %p494, %s26, 1
          %s496 = scalar_lea.vmem %s11, %s495
        $region64: #{tpu_custom_call.1} parent=19 // pred_fallthru
          _
      $region20: #{tpu_custom_call.1} parent=5 // pred_fallthru
        _
      %p497 = scmp.le.s32.totalorder 1, %s26
      %p498 = scmp.lt.s32.totalorder %s26, 3
      %p499 = pnand %p497, %p498
      %p500 = pneg %p499
      // Predicated region
      $region65: #{tpu_custom_call.1} parent=5 // pred_check
        _
      $region66: #{tpu_custom_call.1} parent=5 // pred_check_branch
        %502 = sbr.rel (%p499) target = $region68
      $region67: #{tpu_custom_call.1} parent=5 // pred_region
        %s503 = ssub.s32 %s26, 1
        // Predicated region
        $region69: #{tpu_custom_call.1} parent=67 // pred_check
          %p504 = pneg %p47
        $region70: #{tpu_custom_call.1} parent=67 // pred_check_branch
          %506 = sbr.rel (%p504) target = $region72
        $region71: #{tpu_custom_call.1} parent=67 // pred_region
          %507 = dma.done [#allocation4], 256
        $region72: #{tpu_custom_call.1} parent=67 // pred_fallthru
          _
        %s508 = sand.u32 %s31, 1
        %s509 = scalar_lea.sflag [#allocation7], %s508
        %s510 = sand.u32 %s60, 1
        %s511 = smul.addr %s510, 16
        %s512 = scalar_lea.vmem [#allocation6], %s511
        // Predicated region
        $region73: #{tpu_custom_call.1} parent=67 // pred_check
          %p513 = pneg %p73
        $region74: #{tpu_custom_call.1} parent=67 // pred_check_branch
          %515 = sbr.rel (%p513) target = $region76
        $region75: #{tpu_custom_call.1} parent=67 // pred_region
          %516 = dma.done %s509, 256
        $region76: #{tpu_custom_call.1} parent=67 // pred_fallthru
          _
        %s517 = sand.u32 %s31, 1
        %s518 = scalar_lea.sflag [#allocation7], %s517
        %s519 = sand.u32 %s112, 1
        %s520 = smul.addr %s519, 16
        %s521 = scalar_lea.vmem [#allocation8], %s520
        // Predicated region
        $region77: #{tpu_custom_call.1} parent=67 // pred_check
          %p522 = pneg %p125
        $region78: #{tpu_custom_call.1} parent=67 // pred_check_branch
          %524 = sbr.rel (%p522) target = $region80
        $region79: #{tpu_custom_call.1} parent=67 // pred_region
          %525 = dma.done %s518, 256
        $region80: #{tpu_custom_call.1} parent=67 // pred_fallthru
          _
        %s526 = sand.u32 %s216, 1
        %s527 = scalar_lea.sflag [#allocation10], %s526
        %s528 = sand.u32 %s216, 1
        %s529 = smul.addr %s528, 16
        %s530 = scalar_lea.vmem [#allocation9], %s529
        // Predicated region
        $region81: #{tpu_custom_call.1} parent=67 // pred_check
          %p531 = pneg %p229
        $region82: #{tpu_custom_call.1} parent=67 // pred_check_branch
          %533 = sbr.rel (%p531) target = $region84
        $region83: #{tpu_custom_call.1} parent=67 // pred_region
          %534 = dma.done %s527, 256
        $region84: #{tpu_custom_call.1} parent=67 // pred_fallthru
          _
        %p535 = pneg %p47
        %p536 = pneg %p44
        %s537 = sand.u32 %s31, 1
        %s538 = scalar_lea.sflag [#allocation7], %s537
        %s539 = sand.u32 %s60, 1
        %s540 = smul.addr %s539, 16
        %s541 = scalar_lea.vmem [#allocation6], %s540
        %p542 = pneg %p73
        %p543 = pneg %p70
        %p544 = scmp.lt.s32.totalorder %s31, 1
        %s545 = scalar_select %p544, %s31, 1
        %s546 = scalar_lea.vmem %s2, %s545
        %p547 = pneg %p99
        %p548 = pneg %p96
        %s549 = sand.u32 %s31, 1
        %s550 = scalar_lea.sflag [#allocation7], %s549
        %s551 = sand.u32 %s112, 1
        %s552 = smul.addr %s551, 16
        %s553 = scalar_lea.vmem [#allocation8], %s552
        %p554 = pneg %p125
        %p555 = pneg %p122
        %p556 = scmp.lt.s32.totalorder %s31, 1
        %s557 = scalar_select %p556, %s31, 1
        %s558 = scalar_lea.vmem %s4, %s557
        %p559 = pneg %p151
        %p560 = pneg %p148
        %p561 = scmp.lt.s32.totalorder %s31, 1
        %s562 = scalar_select %p561, %s31, 1
        %s563 = scalar_lea.vmem %s5, %s562
        %p564 = pneg %p177
        %p565 = pneg %p174
        %p566 = scmp.lt.s32.totalorder %s31, 1
        %s567 = scalar_select %p566, %s31, 1
        %s568 = scalar_lea.vmem %s6, %s567
        %p569 = pneg %p203
        %p570 = pneg %p200
        %s571 = sand.u32 %s216, 1
        %s572 = scalar_lea.sflag [#allocation10], %s571
        %s573 = sand.u32 %s216, 1
        %s574 = smul.addr %s573, 16
        %s575 = scalar_lea.vmem [#allocation9], %s574
        %p576 = pneg %p229
        %p577 = pneg %p226
        %p578 = scmp.lt.s32.totalorder %s31, 1
        %s579 = scalar_select %p578, %s31, 1
        %s580 = scalar_lea.vmem %s8, %s579
        %p581 = pneg %p255
        %p582 = pneg %p252
        %p583 = scmp.lt.s32.totalorder %s31, 1
        %s584 = scalar_select %p583, %s31, 1
        %s585 = scalar_lea.vmem %s9, %s584
        %p586 = pneg %p281
        %p587 = pneg %p278
        %p588 = scmp.lt.s32.totalorder %s31, 1
        %s589 = scalar_select %p588, %s31, 1
        %s590 = scalar_lea.vmem %s10, %s589
        %p591 = pneg %p307
        %p592 = pneg %p304
        %p593 = scmp.lt.s32.totalorder %s31, 1
        %s594 = scalar_select %p593, %s31, 1
        %s595 = scalar_lea.vmem %s11, %s594
        %p596 = pneg %p333
        %p597 = pneg %p330
        %p598 = pneg %p354
        %p599 = pneg %p351
        %p600 = scmp.lt.s32.totalorder %s31, 1
        %s601 = scalar_select %p600, %s31, 1
        %s602 = scalar_lea.vmem %s2, %s601
        %p603 = scmp.lt.s32.totalorder %s31, 1
        %s604 = scalar_select %p603, %s31, 1
        %s605 = scalar_lea.vmem %s4, %s604
        %p606 = scmp.lt.s32.totalorder %s31, 1
        %s607 = scalar_select %p606, %s31, 1
        %s608 = scalar_lea.vmem %s5, %s607
        %p609 = scmp.lt.s32.totalorder %s31, 1
        %s610 = scalar_select %p609, %s31, 1
        %s611 = scalar_lea.vmem %s6, %s610
        %p612 = scmp.lt.s32.totalorder %s31, 1
        %s613 = scalar_select %p612, %s31, 1
        %s614 = scalar_lea.vmem %s8, %s613
        %p615 = scmp.lt.s32.totalorder %s31, 1
        %s616 = scalar_select %p615, %s31, 1
        %s617 = scalar_lea.vmem %s9, %s616
        %p618 = scmp.lt.s32.totalorder %s31, 1
        %s619 = scalar_select %p618, %s31, 1
        %s620 = scalar_lea.vmem %s10, %s619
        %p621 = scmp.lt.s32.totalorder %s31, 1
        %s622 = scalar_select %p621, %s31, 1
        %s623 = scalar_lea.vmem %s11, %s622
        %p625 = scmp.eq.s32.totalorder %s31, 0
        // Predicated region
        $region85: #{tpu_custom_call.1} parent=67 // pred_check
          %p626 = pneg %p625
        $region86: #{tpu_custom_call.1} parent=67 // pred_check_branch
          %628 = sbr.rel (%p626) target = $region88
        $region87: #{tpu_custom_call.1} parent=67 // pred_region
          %v629 = vld [vmem:[#allocation3] sm:$0xff]
          %v630 = vld [vmem:[#allocation3 + $0x8] sm:$0xff]
          %vm631 = vcmask 261120
          %632 = vst.msk [vmem:[#allocation11] sm:$0xff] %vm631, %v629
          %633 = vst.msk [vmem:[#allocation11 + $0x8] sm:$0xff] %vm631, %v630
        $region88: #{tpu_custom_call.1} parent=67 // pred_fallthru
          _
        %v634 = vld [vmem:[#allocation11] sm:$0xff]
        %v635 = vld [vmem:[#allocation11 + $0x8] sm:$0xff]
        %v636 = vpack.c.bf16 %v635, %v634
        %v637 = vld [vmem:[%s512] sm:$0xf]
        %v638 = vld [vmem:[%s512 + $0x4] sm:$0xf]
        %v639 = vld [vmem:[%s512 + $0x8] sm:$0xf]
        %v640 = vld [vmem:[%s512 + $0xc] sm:$0xf]
        %v641 = vld [vmem:[%s602] sm:$0x1]
        %v643 = vlaneseq
        %v644 = vshrl.u32 %v643, 7
        %v645 = vsub.s32 0, %v644
        %v646 = vrot.slane %v641, %v645
        %v652 = vunpack.c.l.b16 %v637
        %v653 = vunpack.c.l.b16 %v638
        %v654 = vunpack.c.l.b16 %v639
        %v655 = vunpack.c.l.b16 %v640
        %v656 = vpack.c.b16 %v653, %v652
        %v657 = vpack.c.b16 %v655, %v654
        %vm660 = vcmask 261120
        %v662 = vsel %vm660, %v636, 0
        %664 = vmatprep.subr.bf16.mxu0 0
        %665 = vmatpush1.bf16.msra.mxu0 %v656
        %666 = vmatprep.subr.bf16.mxu0 0
        %667 = vmatpush1.bf16.msra.mxu0 %v657
        %668 = vmatprep.subr.bf16.mxu0 0
        %669 = vmatpush1.bf16.msra.mxu0 0
        %670 = vmatprep.subr.bf16.mxu0 0
        %671 = vmatpush1.bf16.msra.mxu0 0
        %672 = vmatprep.subr.bf16.mxu0 0
        %673 = vmatpush1.bf16.msra.mxu0 0
        %674 = vmatprep.subr.bf16.mxu0 0
        %675 = vmatpush1.bf16.msra.mxu0 0
        %676 = vmatprep.subr.bf16.mxu0 0
        %677 = vmatpush1.bf16.msra.mxu0 0
        %678 = vmatprep.subr.bf16.mxu0 0
        %679 = vmatpush1.bf16.msra.mxu0 0
        %680 = vmatprep.subr.bf16.mxu0 0
        %681 = vmatpush1.bf16.msra.mxu0 0
        %682 = vmatprep.subr.bf16.mxu0 0
        %683 = vmatpush1.bf16.msra.mxu0 0
        %684 = vmatprep.subr.bf16.mxu0 0
        %685 = vmatpush1.bf16.msra.mxu0 0
        %686 = vmatprep.subr.bf16.mxu0 0
        %687 = vmatpush1.bf16.msra.mxu0 0
        %688 = vmatprep.subr.bf16.mxu0 0
        %689 = vmatpush1.bf16.msra.mxu0 0
        %690 = vmatprep.subr.bf16.mxu0 0
        %691 = vmatpush1.bf16.msra.mxu0 0
        %692 = vmatprep.subr.bf16.mxu0 0
        %693 = vmatpush1.bf16.msra.mxu0 0
        %694 = vmatprep.subr.bf16.mxu0 0
        %695 = vmatpush1.bf16.msra.mxu0 0
        %696 = vmatprep.mubr.bf16.mxu0 0
        %697 = vmatmul.mubr.bf16.gmra.mrb[0].mxu0 %v662
        %v698 = vpop.f32.mrb[0].mxu0
        %v699 = vadd.f32 %v646, %v698
        %v700 = vpop.f32.mrb[0].mxu0
        %v701 = vpop.f32.mrb[0].mxu0
        %v702 = vadd.f32 %v646, %v701
        %v703 = vpop.f32.mrb[0].mxu0
        %704 = vdwg.mxu0
        %v705 = vpack.c.bf16 %v699, %v699
        %v706 = vpack.c.bf16 %v702, %v702
        %708 = vrot.lane.b32.xlu0 %v705, 96
        %v709 = vpop.permute.xlu0 %708
        %vm710 = vcmask 64512
        %v712 = vsel %vm710, %v705, 0
        %v715 = vsel %vm710, %v709, 0
        %717 = vmatprep.subr.bf16.mxu0 0
        %718 = vmatpush1.bf16.xpose.msra.mxu0 %v715
        %719 = vmatprep.subr.bf16.mxu0 0
        %720 = vmatpush1.bf16.xpose.msra.mxu0 0
        %721 = vmatprep.subr.bf16.mxu0 0
        %722 = vmatpush1.bf16.xpose.msra.mxu0 0
        %723 = vmatprep.subr.bf16.mxu0 0
        %724 = vmatpush1.bf16.xpose.msra.mxu0 0
        %725 = vmatprep.subr.bf16.mxu0 0
        %726 = vmatpush1.bf16.xpose.msra.mxu0 0
        %727 = vmatprep.subr.bf16.mxu0 0
        %728 = vmatpush1.bf16.xpose.msra.mxu0 0
        %729 = vmatprep.subr.bf16.mxu0 0
        %730 = vmatpush1.bf16.xpose.msra.mxu0 0
        %731 = vmatprep.subr.bf16.mxu0 0
        %732 = vmatpush1.bf16.xpose.msra.mxu0 0
        %733 = vmatprep.subr.bf16.mxu0 0
        %734 = vmatpush1.bf16.xpose.msra.mxu0 0
        %735 = vmatprep.subr.bf16.mxu0 0
        %736 = vmatpush1.bf16.xpose.msra.mxu0 0
        %737 = vmatprep.subr.bf16.mxu0 0
        %738 = vmatpush1.bf16.xpose.msra.mxu0 0
        %739 = vmatprep.subr.bf16.mxu0 0
        %740 = vmatpush1.bf16.xpose.msra.mxu0 0
        %741 = vmatprep.subr.bf16.mxu0 0
        %742 = vmatpush1.bf16.xpose.msra.mxu0 0
        %743 = vmatprep.subr.bf16.mxu0 0
        %744 = vmatpush1.bf16.xpose.msra.mxu0 0
        %745 = vmatprep.subr.bf16.mxu0 0
        %746 = vmatpush1.bf16.xpose.msra.mxu0 0
        %747 = vmatprep.subr.bf16.mxu0 0
        %748 = vmatpush1.bf16.xpose.msra.mxu0 0
        %749 = vmatprep.mubr.bf16.mxu0 0
        %750 = vmatmul.mubr.bf16.gmra.mrb[0].mxu0 %v712
        %v751 = vpop.f32.mrb[0].mxu0
        %v752 = vadd.f32 0.0, %v751
        %v753 = vpop.f32.mrb[0].mxu0
        %v754 = vpop.f32.mrb[0].mxu0
        %v755 = vpop.f32.mrb[0].mxu0
        %756 = vdwg.mxu0
        %758 = vrot.lane.b32.xlu0 %v706, 96
        %v759 = vpop.permute.xlu0 %758
        %v761 = vsel %vm710, %v706, 0
        %v764 = vsel %vm710, %v759, 0
        %766 = vmatprep.subr.bf16.mxu0 0
        %767 = vmatpush1.bf16.xpose.msra.mxu0 %v764
        %768 = vmatprep.subr.bf16.mxu0 0
        %769 = vmatpush1.bf16.xpose.msra.mxu0 0
        %770 = vmatprep.subr.bf16.mxu0 0
        %771 = vmatpush1.bf16.xpose.msra.mxu0 0
        %772 = vmatprep.subr.bf16.mxu0 0
        %773 = vmatpush1.bf16.xpose.msra.mxu0 0
        %774 = vmatprep.subr.bf16.mxu0 0
        %775 = vmatpush1.bf16.xpose.msra.mxu0 0
        %776 = vmatprep.subr.bf16.mxu0 0
        %777 = vmatpush1.bf16.xpose.msra.mxu0 0
        %778 = vmatprep.subr.bf16.mxu0 0
        %779 = vmatpush1.bf16.xpose.msra.mxu0 0
        %780 = vmatprep.subr.bf16.mxu0 0
        %781 = vmatpush1.bf16.xpose.msra.mxu0 0
        %782 = vmatprep.subr.bf16.mxu0 0
        %783 = vmatpush1.bf16.xpose.msra.mxu0 0
        %784 = vmatprep.subr.bf16.mxu0 0
        %785 = vmatpush1.bf16.xpose.msra.mxu0 0
        %786 = vmatprep.subr.bf16.mxu0 0
        %787 = vmatpush1.bf16.xpose.msra.mxu0 0
        %788 = vmatprep.subr.bf16.mxu0 0
        %789 = vmatpush1.bf16.xpose.msra.mxu0 0
        %790 = vmatprep.subr.bf16.mxu0 0
        %791 = vmatpush1.bf16.xpose.msra.mxu0 0
        %792 = vmatprep.subr.bf16.mxu0 0
        %793 = vmatpush1.bf16.xpose.msra.mxu0 0
        %794 = vmatprep.subr.bf16.mxu0 0
        %795 = vmatpush1.bf16.xpose.msra.mxu0 0
        %796 = vmatprep.subr.bf16.mxu0 0
        %797 = vmatpush1.bf16.xpose.msra.mxu0 0
        %798 = vmatprep.mubr.bf16.mxu0 0
        %799 = vmatmul.mubr.bf16.gmra.mrb[0].mxu0 %v761
        %v800 = vpop.f32.mrb[0].mxu0
        %v801 = vadd.f32 0.0, %v800
        %v802 = vpop.f32.mrb[0].mxu0
        %v803 = vpop.f32.mrb[0].mxu0
        %v804 = vpop.f32.mrb[0].mxu0
        %805 = vdwg.mxu0
        %v806 = vmul.f32 %v752, 0.35355338
        %v807 = vmul.f32 %v801, 0.35355338
        %v808 = vsel %vm710, %v806, -inf
        %809 = vmax.xlane.f32.xlu0 %v808
        %v810 = vpop.xlane.xlu0 %809
        %v811 = vsel %vm710, %v807, -inf
        %812 = vmax.xlane.f32.xlu0 %v811
        %v813 = vpop.xlane.xlu0 %812
        %v814 = vsub.f32 %v806, %v810
        %v815 = vsub.f32 %v807, %v813
        %v816 = vmul.f32 %v814, 1.442695
        %v817 = vpow.pop %v816
        %v818 = vmul.f32 %v815, 1.442695
        %v819 = vpow.pop %v818
        %v820 = vsel %vm710, %v817, 0.0
        %821 = vadd.xlane.f32.xlu0 %v820
        %v822 = vpop.xlane.xlu0 %821
        %v823 = vsel %vm710, %v819, 0.0
        %824 = vadd.xlane.f32.xlu0 %v823
        %v825 = vpop.xlane.xlu0 %824
        %v826 = vrcp.pop %v822
        %v827 = vrcp.pop %v825
        %v828 = vmul.f32 %v817, %v826
        %v829 = vmul.f32 %v819, %v827
        %v830 = vpack.c.bf16 %v828, %v828
        %v831 = vpack.c.bf16 %v829, %v829
        %832 = vrot.lane.b32.xlu0 %v705, 64
        %v833 = vpop.permute.xlu0 %832
        %v835 = vsel %vm710, %v830, 0
        %vm837 = vcmask 1043456
        %v839 = vsel %vm837, %v833, 0
        %841 = vmatprep.subr.bf16.mxu0 0
        %842 = vmatpush1.bf16.msra.mxu0 %v839
        %843 = vmatprep.subr.bf16.mxu0 0
        %844 = vmatpush1.bf16.msra.mxu0 0
        %845 = vmatprep.subr.bf16.mxu0 0
        %846 = vmatpush1.bf16.msra.mxu0 0
        %847 = vmatprep.subr.bf16.mxu0 0
        %848 = vmatpush1.bf16.msra.mxu0 0
        %849 = vmatprep.subr.bf16.mxu0 0
        %850 = vmatpush1.bf16.msra.mxu0 0
        %851 = vmatprep.subr.bf16.mxu0 0
        %852 = vmatpush1.bf16.msra.mxu0 0
        %853 = vmatprep.subr.bf16.mxu0 0
        %854 = vmatpush1.bf16.msra.mxu0 0
        %855 = vmatprep.subr.bf16.mxu0 0
        %856 = vmatpush1.bf16.msra.mxu0 0
        %857 = vmatprep.subr.bf16.mxu0 0
        %858 = vmatpush1.bf16.msra.mxu0 0
        %859 = vmatprep.subr.bf16.mxu0 0
        %860 = vmatpush1.bf16.msra.mxu0 0
        %861 = vmatprep.subr.bf16.mxu0 0
        %862 = vmatpush1.bf16.msra.mxu0 0
        %863 = vmatprep.subr.bf16.mxu0 0
        %864 = vmatpush1.bf16.msra.mxu0 0
        %865 = vmatprep.subr.bf16.mxu0 0
        %866 = vmatpush1.bf16.msra.mxu0 0
        %867 = vmatprep.subr.bf16.mxu0 0
        %868 = vmatpush1.bf16.msra.mxu0 0
        %869 = vmatprep.subr.bf16.mxu0 0
        %870 = vmatpush1.bf16.msra.mxu0 0
        %871 = vmatprep.subr.bf16.mxu0 0
        %872 = vmatpush1.bf16.msra.mxu0 0
        %873 = vmatprep.mubr.bf16.mxu0 0
        %874 = vmatmul.mubr.bf16.gmra.mrb[0].mxu0 %v835
        %v875 = vpop.f32.mrb[0].mxu0
        %v876 = vadd.f32 0.0, %v875
        %v877 = vpop.f32.mrb[0].mxu0
        %v878 = vpop.f32.mrb[0].mxu0
        %v879 = vpop.f32.mrb[0].mxu0
        %880 = vdwg.mxu0
        %881 = vrot.lane.b32.xlu0 %v706, 64
        %v882 = vpop.permute.xlu0 %881
        %v884 = vsel %vm710, %v831, 0
        %v887 = vsel %vm837, %v882, 0
        %889 = vmatprep.subr.bf16.mxu0 0
        %890 = vmatpush1.bf16.msra.mxu0 %v887
        %891 = vmatprep.subr.bf16.mxu0 0
        %892 = vmatpush1.bf16.msra.mxu0 0
        %893 = vmatprep.subr.bf16.mxu0 0
        %894 = vmatpush1.bf16.msra.mxu0 0
        %895 = vmatprep.subr.bf16.mxu0 0
        %896 = vmatpush1.bf16.msra.mxu0 0
        %897 = vmatprep.subr.bf16.mxu0 0
        %898 = vmatpush1.bf16.msra.mxu0 0
        %899 = vmatprep.subr.bf16.mxu0 0
        %900 = vmatpush1.bf16.msra.mxu0 0
        %901 = vmatprep.subr.bf16.mxu0 0
        %902 = vmatpush1.bf16.msra.mxu0 0
        %903 = vmatprep.subr.bf16.mxu0 0
        %904 = vmatpush1.bf16.msra.mxu0 0
        %905 = vmatprep.subr.bf16.mxu0 0
        %906 = vmatpush1.bf16.msra.mxu0 0
        %907 = vmatprep.subr.bf16.mxu0 0
        %908 = vmatpush1.bf16.msra.mxu0 0
        %909 = vmatprep.subr.bf16.mxu0 0
        %910 = vmatpush1.bf16.msra.mxu0 0
        %911 = vmatprep.subr.bf16.mxu0 0
        %912 = vmatpush1.bf16.msra.mxu0 0
        %913 = vmatprep.subr.bf16.mxu0 0
        %914 = vmatpush1.bf16.msra.mxu0 0
        %915 = vmatprep.subr.bf16.mxu0 0
        %916 = vmatpush1.bf16.msra.mxu0 0
        %917 = vmatprep.subr.bf16.mxu0 0
        %918 = vmatpush1.bf16.msra.mxu0 0
        %919 = vmatprep.subr.bf16.mxu0 0
        %920 = vmatpush1.bf16.msra.mxu0 0
        %921 = vmatprep.mubr.bf16.mxu0 0
        %922 = vmatmul.mubr.bf16.gmra.mrb[0].mxu0 %v884
        %v923 = vpop.f32.mrb[0].mxu0
        %v924 = vadd.f32 0.0, %v923
        %v925 = vpop.f32.mrb[0].mxu0
        %v926 = vpop.f32.mrb[0].mxu0
        %v927 = vpop.f32.mrb[0].mxu0
        %928 = vdwg.mxu0
        %929 = vst.msk [vmem:[#allocation2] sm:$0xff] %vm710, %v876
        %930 = vst.msk [vmem:[#allocation2 + $0x8] sm:$0xff] %vm710, %v924
        %931 = vrot.lane.b32.xlu0 %v705, 120
        %v932 = vpop.permute.xlu0 %931
        %933 = vrot.lane.b32.xlu0 %v705, 88
        %v934 = vpop.permute.xlu0 %933
        %v936 = vsel %vm710, %v932, 0
        %v939 = vsel %vm710, %v934, 0
        %941 = vmatprep.subr.bf16.mxu0 0
        %942 = vmatpush1.bf16.xpose.msra.mxu0 %v939
        %943 = vmatprep.subr.bf16.mxu0 0
        %944 = vmatpush1.bf16.xpose.msra.mxu0 0
        %945 = vmatprep.subr.bf16.mxu0 0
        %946 = vmatpush1.bf16.xpose.msra.mxu0 0
        %947 = vmatprep.subr.bf16.mxu0 0
        %948 = vmatpush1.bf16.xpose.msra.mxu0 0
        %949 = vmatprep.subr.bf16.mxu0 0
        %950 = vmatpush1.bf16.xpose.msra.mxu0 0
        %951 = vmatprep.subr.bf16.mxu0 0
        %952 = vmatpush1.bf16.xpose.msra.mxu0 0
        %953 = vmatprep.subr.bf16.mxu0 0
        %954 = vmatpush1.bf16.xpose.msra.mxu0 0
        %955 = vmatprep.subr.bf16.mxu0 0
        %956 = vmatpush1.bf16.xpose.msra.mxu0 0
        %957 = vmatprep.subr.bf16.mxu0 0
        %958 = vmatpush1.bf16.xpose.msra.mxu0 0
        %959 = vmatprep.subr.bf16.mxu0 0
        %960 = vmatpush1.bf16.xpose.msra.mxu0 0
        %961 = vmatprep.subr.bf16.mxu0 0
        %962 = vmatpush1.bf16.xpose.msra.mxu0 0
        %963 = vmatprep.subr.bf16.mxu0 0
        %964 = vmatpush1.bf16.xpose.msra.mxu0 0
        %965 = vmatprep.subr.bf16.mxu0 0
        %966 = vmatpush1.bf16.xpose.msra.mxu0 0
        %967 = vmatprep.subr.bf16.mxu0 0
        %968 = vmatpush1.bf16.xpose.msra.mxu0 0
        %969 = vmatprep.subr.bf16.mxu0 0
        %970 = vmatpush1.bf16.xpose.msra.mxu0 0
        %971 = vmatprep.subr.bf16.mxu0 0
        %972 = vmatpush1.bf16.xpose.msra.mxu0 0
        %973 = vmatprep.mubr.bf16.mxu0 0
        %974 = vmatmul.mubr.bf16.gmra.mrb[0].mxu0 %v936
        %v975 = vpop.f32.mrb[0].mxu0
        %v976 = vadd.f32 0.0, %v975
        %v977 = vpop.f32.mrb[0].mxu0
        %v978 = vpop.f32.mrb[0].mxu0
        %v979 = vpop.f32.mrb[0].mxu0
        %980 = vdwg.mxu0
        %981 = vrot.lane.b32.xlu0 %v706, 120
        %v982 = vpop.permute.xlu0 %981
        %983 = vrot.lane.b32.xlu0 %v706, 88
        %v984 = vpop.permute.xlu0 %983
        %v986 = vsel %vm710, %v982, 0
        %v989 = vsel %vm710, %v984, 0
        %991 = vmatprep.subr.bf16.mxu0 0
        %992 = vmatpush1.bf16.xpose.msra.mxu0 %v989
        %993 = vmatprep.subr.bf16.mxu0 0
        %994 = vmatpush1.bf16.xpose.msra.mxu0 0
        %995 = vmatprep.subr.bf16.mxu0 0
        %996 = vmatpush1.bf16.xpose.msra.mxu0 0
        %997 = vmatprep.subr.bf16.mxu0 0
        %998 = vmatpush1.bf16.xpose.msra.mxu0 0
        %999 = vmatprep.subr.bf16.mxu0 0
        %1000 = vmatpush1.bf16.xpose.msra.mxu0 0
        %1001 = vmatprep.subr.bf16.mxu0 0
        %1002 = vmatpush1.bf16.xpose.msra.mxu0 0
        %1003 = vmatprep.subr.bf16.mxu0 0
        %1004 = vmatpush1.bf16.xpose.msra.mxu0 0
        %1005 = vmatprep.subr.bf16.mxu0 0
        %1006 = vmatpush1.bf16.xpose.msra.mxu0 0
        %1007 = vmatprep.subr.bf16.mxu0 0
        %1008 = vmatpush1.bf16.xpose.msra.mxu0 0
        %1009 = vmatprep.subr.bf16.mxu0 0
        %1010 = vmatpush1.bf16.xpose.msra.mxu0 0
        %1011 = vmatprep.subr.bf16.mxu0 0
        %1012 = vmatpush1.bf16.xpose.msra.mxu0 0
        %1013 = vmatprep.subr.bf16.mxu0 0
        %1014 = vmatpush1.bf16.xpose.msra.mxu0 0
        %1015 = vmatprep.subr.bf16.mxu0 0
        %1016 = vmatpush1.bf16.xpose.msra.mxu0 0
        %1017 = vmatprep.subr.bf16.mxu0 0
        %1018 = vmatpush1.bf16.xpose.msra.mxu0 0
        %1019 = vmatprep.subr.bf16.mxu0 0
        %1020 = vmatpush1.bf16.xpose.msra.mxu0 0
        %1021 = vmatprep.subr.bf16.mxu0 0
        %1022 = vmatpush1.bf16.xpose.msra.mxu0 0
        %1023 = vmatprep.mubr.bf16.mxu0 0
        %1024 = vmatmul.mubr.bf16.gmra.mrb[0].mxu0 %v986
        %v1025 = vpop.f32.mrb[0].mxu0
        %v1026 = vadd.f32 0.0, %v1025
        %v1027 = vpop.f32.mrb[0].mxu0
        %v1028 = vpop.f32.mrb[0].mxu0
        %v1029 = vpop.f32.mrb[0].mxu0
        %1030 = vdwg.mxu0
        %v1031 = vmul.f32 %v976, 0.35355338
        %v1032 = vmul.f32 %v1026, 0.35355338
        %v1033 = vsel %vm710, %v1031, -inf
        %1034 = vmax.xlane.f32.xlu0 %v1033
        %v1035 = vpop.xlane.xlu0 %1034
        %v1036 = vsel %vm710, %v1032, -inf
        %1037 = vmax.xlane.f32.xlu0 %v1036
        %v1038 = vpop.xlane.xlu0 %1037
        %v1039 = vsub.f32 %v1031, %v1035
        %v1040 = vsub.f32 %v1032, %v1038
        %v1041 = vmul.f32 %v1039, 1.442695
        %v1042 = vpow.pop %v1041
        %v1043 = vmul.f32 %v1040, 1.442695
        %v1044 = vpow.pop %v1043
        %v1045 = vsel %vm710, %v1042, 0.0
        %1046 = vadd.xlane.f32.xlu0 %v1045
        %v1047 = vpop.xlane.xlu0 %1046
        %v1048 = vsel %vm710, %v1044, 0.0
        %1049 = vadd.xlane.f32.xlu0 %v1048
        %v1050 = vpop.xlane.xlu0 %1049
        %v1051 = vrcp.pop %v1047
        %v1052 = vrcp.pop %v1050
        %v1053 = vmul.f32 %v1042, %v1051
        %v1054 = vmul.f32 %v1044, %v1052
        %v1055 = vpack.c.bf16 %v1053, %v1053
        %v1056 = vpack.c.bf16 %v1054, %v1054
        %1057 = vrot.lane.b32.xlu0 %v705, 56
        %v1058 = vpop.permute.xlu0 %1057
        %v1060 = vsel %vm710, %v1055, 0
        %v1063 = vsel %vm837, %v1058, 0
        %1065 = vmatprep.subr.bf16.mxu0 0
        %1066 = vmatpush1.bf16.msra.mxu0 %v1063
        %1067 = vmatprep.subr.bf16.mxu0 0
        %1068 = vmatpush1.bf16.msra.mxu0 0
        %1069 = vmatprep.subr.bf16.mxu0 0
        %1070 = vmatpush1.bf16.msra.mxu0 0
        %1071 = vmatprep.subr.bf16.mxu0 0
        %1072 = vmatpush1.bf16.msra.mxu0 0
        %1073 = vmatprep.subr.bf16.mxu0 0
        %1074 = vmatpush1.bf16.msra.mxu0 0
        %1075 = vmatprep.subr.bf16.mxu0 0
        %1076 = vmatpush1.bf16.msra.mxu0 0
        %1077 = vmatprep.subr.bf16.mxu0 0
        %1078 = vmatpush1.bf16.msra.mxu0 0
        %1079 = vmatprep.subr.bf16.mxu0 0
        %1080 = vmatpush1.bf16.msra.mxu0 0
        %1081 = vmatprep.subr.bf16.mxu0 0
        %1082 = vmatpush1.bf16.msra.mxu0 0
        %1083 = vmatprep.subr.bf16.mxu0 0
        %1084 = vmatpush1.bf16.msra.mxu0 0
        %1085 = vmatprep.subr.bf16.mxu0 0
        %1086 = vmatpush1.bf16.msra.mxu0 0
        %1087 = vmatprep.subr.bf16.mxu0 0
        %1088 = vmatpush1.bf16.msra.mxu0 0
        %1089 = vmatprep.subr.bf16.mxu0 0
        %1090 = vmatpush1.bf16.msra.mxu0 0
        %1091 = vmatprep.subr.bf16.mxu0 0
        %1092 = vmatpush1.bf16.msra.mxu0 0
        %1093 = vmatprep.subr.bf16.mxu0 0
        %1094 = vmatpush1.bf16.msra.mxu0 0
        %1095 = vmatprep.subr.bf16.mxu0 0
        %1096 = vmatpush1.bf16.msra.mxu0 0
        %1097 = vmatprep.mubr.bf16.mxu0 0
        %1098 = vmatmul.mubr.bf16.gmra.mrb[0].mxu0 %v1060
        %v1099 = vpop.f32.mrb[0].mxu0
        %v1100 = vadd.f32 0.0, %v1099
        %v1101 = vpop.f32.mrb[0].mxu0
        %v1102 = vpop.f32.mrb[0].mxu0
        %v1103 = vpop.f32.mrb[0].mxu0
        %1104 = vdwg.mxu0
        %1105 = vrot.lane.b32.xlu0 %v706, 56
        %v1106 = vpop.permute.xlu0 %1105
        %v1108 = vsel %vm710, %v1056, 0
        %v1111 = vsel %vm837, %v1106, 0
        %1113 = vmatprep.subr.bf16.mxu0 0
        %1114 = vmatpush1.bf16.msra.mxu0 %v1111
        %1115 = vmatprep.subr.bf16.mxu0 0
        %1116 = vmatpush1.bf16.msra.mxu0 0
        %1117 = vmatprep.subr.bf16.mxu0 0
        %1118 = vmatpush1.bf16.msra.mxu0 0
        %1119 = vmatprep.subr.bf16.mxu0 0
        %1120 = vmatpush1.bf16.msra.mxu0 0
        %1121 = vmatprep.subr.bf16.mxu0 0
        %1122 = vmatpush1.bf16.msra.mxu0 0
        %1123 = vmatprep.subr.bf16.mxu0 0
        %1124 = vmatpush1.bf16.msra.mxu0 0
        %1125 = vmatprep.subr.bf16.mxu0 0
        %1126 = vmatpush1.bf16.msra.mxu0 0
        %1127 = vmatprep.subr.bf16.mxu0 0
        %1128 = vmatpush1.bf16.msra.mxu0 0
        %1129 = vmatprep.subr.bf16.mxu0 0
        %1130 = vmatpush1.bf16.msra.mxu0 0
        %1131 = vmatprep.subr.bf16.mxu0 0
        %1132 = vmatpush1.bf16.msra.mxu0 0
        %1133 = vmatprep.subr.bf16.mxu0 0
        %1134 = vmatpush1.bf16.msra.mxu0 0
        %1135 = vmatprep.subr.bf16.mxu0 0
        %1136 = vmatpush1.bf16.msra.mxu0 0
        %1137 = vmatprep.subr.bf16.mxu0 0
        %1138 = vmatpush1.bf16.msra.mxu0 0
        %1139 = vmatprep.subr.bf16.mxu0 0
        %1140 = vmatpush1.bf16.msra.mxu0 0
        %1141 = vmatprep.subr.bf16.mxu0 0
        %1142 = vmatpush1.bf16.msra.mxu0 0
        %1143 = vmatprep.subr.bf16.mxu0 0
        %1144 = vmatpush1.bf16.msra.mxu0 0
        %1145 = vmatprep.mubr.bf16.mxu0 0
        %1146 = vmatmul.mubr.bf16.gmra.mrb[0].mxu0 %v1108
        %v1147 = vpop.f32.mrb[0].mxu0
        %v1148 = vadd.f32 0.0, %v1147
        %v1149 = vpop.f32.mrb[0].mxu0
        %v1150 = vpop.f32.mrb[0].mxu0
        %v1151 = vpop.f32.mrb[0].mxu0
        %1152 = vdwg.mxu0
        %1155 = vrot.lane.b32.xlu0 %v1100, 8
        %v1156 = vpop.permute.xlu0 %1155
        %1157 = vrot.lane.b32.xlu0 %v1148, 8
        %v1158 = vpop.permute.xlu0 %1157
        %vm1161 = vcmask 130112
        %1162 = vst.msk [vmem:[#allocation2] sm:$0xff] %vm1161, %v1156
        %1163 = vst.msk [vmem:[#allocation2 + $0x8] sm:$0xff] %vm1161, %v1158
        %1164 = vrot.lane.b32.xlu0 %v705, 112
        %v1165 = vpop.permute.xlu0 %1164
        %1166 = vrot.lane.b32.xlu0 %v705, 80
        %v1167 = vpop.permute.xlu0 %1166
        %v1169 = vsel %vm710, %v1165, 0
        %v1172 = vsel %vm710, %v1167, 0
        %1174 = vmatprep.subr.bf16.mxu0 0
        %1175 = vmatpush1.bf16.xpose.msra.mxu0 %v1172
        %1176 = vmatprep.subr.bf16.mxu0 0
        %1177 = vmatpush1.bf16.xpose.msra.mxu0 0
        %1178 = vmatprep.subr.bf16.mxu0 0
        %1179 = vmatpush1.bf16.xpose.msra.mxu0 0
        %1180 = vmatprep.subr.bf16.mxu0 0
        %1181 = vmatpush1.bf16.xpose.msra.mxu0 0
        %1182 = vmatprep.subr.bf16.mxu0 0
        %1183 = vmatpush1.bf16.xpose.msra.mxu0 0
        %1184 = vmatprep.subr.bf16.mxu0 0
        %1185 = vmatpush1.bf16.xpose.msra.mxu0 0
        %1186 = vmatprep.subr.bf16.mxu0 0
        %1187 = vmatpush1.bf16.xpose.msra.mxu0 0
        %1188 = vmatprep.subr.bf16.mxu0 0
        %1189 = vmatpush1.bf16.xpose.msra.mxu0 0
        %1190 = vmatprep.subr.bf16.mxu0 0
        %1191 = vmatpush1.bf16.xpose.msra.mxu0 0
        %1192 = vmatprep.subr.bf16.mxu0 0
        %1193 = vmatpush1.bf16.xpose.msra.mxu0 0
        %1194 = vmatprep.subr.bf16.mxu0 0
        %1195 = vmatpush1.bf16.xpose.msra.mxu0 0
        %1196 = vmatprep.subr.bf16.mxu0 0
        %1197 = vmatpush1.bf16.xpose.msra.mxu0 0
        %1198 = vmatprep.subr.bf16.mxu0 0
        %1199 = vmatpush1.bf16.xpose.msra.mxu0 0
        %1200 = vmatprep.subr.bf16.mxu0 0
        %1201 = vmatpush1.bf16.xpose.msra.mxu0 0
        %1202 = vmatprep.subr.bf16.mxu0 0
        %1203 = vmatpush1.bf16.xpose.msra.mxu0 0
        %1204 = vmatprep.subr.bf16.mxu0 0
        %1205 = vmatpush1.bf16.xpose.msra.mxu0 0
        %1206 = vmatprep.mubr.bf16.mxu0 0
        %1207 = vmatmul.mubr.bf16.gmra.mrb[0].mxu0 %v1169
        %v1208 = vpop.f32.mrb[0].mxu0
        %v1209 = vadd.f32 0.0, %v1208
        %v1210 = vpop.f32.mrb[0].mxu0
        %v1211 = vpop.f32.mrb[0].mxu0
        %v1212 = vpop.f32.mrb[0].mxu0
        %1213 = vdwg.mxu0
        %1214 = vrot.lane.b32.xlu0 %v706, 112
        %v1215 = vpop.permute.xlu0 %1214
        %1216 = vrot.lane.b32.xlu0 %v706, 80
        %v1217 = vpop.permute.xlu0 %1216
        %v1219 = vsel %vm710, %v1215, 0
        %v1222 = vsel %vm710, %v1217, 0
        %1224 = vmatprep.subr.bf16.mxu0 0
        %1225 = vmatpush1.bf16.xpose.msra.mxu0 %v1222
        %1226 = vmatprep.subr.bf16.mxu0 0
        %1227 = vmatpush1.bf16.xpose.msra.mxu0 0
        %1228 = vmatprep.subr.bf16.mxu0 0
        %1229 = vmatpush1.bf16.xpose.msra.mxu0 0
        %1230 = vmatprep.subr.bf16.mxu0 0
        %1231 = vmatpush1.bf16.xpose.msra.mxu0 0
        %1232 = vmatprep.subr.bf16.mxu0 0
        %1233 = vmatpush1.bf16.xpose.msra.mxu0 0
        %1234 = vmatprep.subr.bf16.mxu0 0
        %1235 = vmatpush1.bf16.xpose.msra.mxu0 0
        %1236 = vmatprep.subr.bf16.mxu0 0
        %1237 = vmatpush1.bf16.xpose.msra.mxu0 0
        %1238 = vmatprep.subr.bf16.mxu0 0
        %1239 = vmatpush1.bf16.xpose.msra.mxu0 0
        %1240 = vmatprep.subr.bf16.mxu0 0
        %1241 = vmatpush1.bf16.xpose.msra.mxu0 0
        %1242 = vmatprep.subr.bf16.mxu0 0
        %1243 = vmatpush1.bf16.xpose.msra.mxu0 0
        %1244 = vmatprep.subr.bf16.mxu0 0
        %1245 = vmatpush1.bf16.xpose.msra.mxu0 0
        %1246 = vmatprep.subr.bf16.mxu0 0
        %1247 = vmatpush1.bf16.xpose.msra.mxu0 0
        %1248 = vmatprep.subr.bf16.mxu0 0
        %1249 = vmatpush1.bf16.xpose.msra.mxu0 0
        %1250 = vmatprep.subr.bf16.mxu0 0
        %1251 = vmatpush1.bf16.xpose.msra.mxu0 0
        %1252 = vmatprep.subr.bf16.mxu0 0
        %1253 = vmatpush1.bf16.xpose.msra.mxu0 0
        %1254 = vmatprep.subr.bf16.mxu0 0
        %1255 = vmatpush1.bf16.xpose.msra.mxu0 0
        %1256 = vmatprep.mubr.bf16.mxu0 0
        %1257 = vmatmul.mubr.bf16.gmra.mrb[0].mxu0 %v1219
        %v1258 = vpop.f32.mrb[0].mxu0
        %v1259 = vadd.f32 0.0, %v1258
        %v1260 = vpop.f32.mrb[0].mxu0
        %v1261 = vpop.f32.mrb[0].mxu0
        %v1262 = vpop.f32.mrb[0].mxu0
        %1263 = vdwg.mxu0
        %v1264 = vmul.f32 %v1209, 0.35355338
        %v1265 = vmul.f32 %v1259, 0.35355338
        %v1266 = vsel %vm710, %v1264, -inf
        %1267 = vmax.xlane.f32.xlu0 %v1266
        %v1268 = vpop.xlane.xlu0 %1267
        %v1269 = vsel %vm710, %v1265, -inf
        %1270 = vmax.xlane.f32.xlu0 %v1269
        %v1271 = vpop.xlane.xlu0 %1270
        %v1272 = vsub.f32 %v1264, %v1268
        %v1273 = vsub.f32 %v1265, %v1271
        %v1274 = vmul.f32 %v1272, 1.442695
        %v1275 = vpow.pop %v1274
        %v1276 = vmul.f32 %v1273, 1.442695
        %v1277 = vpow.pop %v1276
        %v1278 = vsel %vm710, %v1275, 0.0
        %1279 = vadd.xlane.f32.xlu0 %v1278
        %v1280 = vpop.xlane.xlu0 %1279
        %v1281 = vsel %vm710, %v1277, 0.0
        %1282 = vadd.xlane.f32.xlu0 %v1281
        %v1283 = vpop.xlane.xlu0 %1282
        %v1284 = vrcp.pop %v1280
        %v1285 = vrcp.pop %v1283
        %v1286 = vmul.f32 %v1275, %v1284
        %v1287 = vmul.f32 %v1277, %v1285
        %v1288 = vpack.c.bf16 %v1286, %v1286
        %v1289 = vpack.c.bf16 %v1287, %v1287
        %1290 = vrot.lane.b32.xlu0 %v705, 48
        %v1291 = vpop.permute.xlu0 %1290
        %v1293 = vsel %vm710, %v1288, 0
        %v1296 = vsel %vm837, %v1291, 0
        %1298 = vmatprep.subr.bf16.mxu0 0
        %1299 = vmatpush1.bf16.msra.mxu0 %v1296
        %1300 = vmatprep.subr.bf16.mxu0 0
        %1301 = vmatpush1.bf16.msra.mxu0 0
        %1302 = vmatprep.subr.bf16.mxu0 0
        %1303 = vmatpush1.bf16.msra.mxu0 0
        %1304 = vmatprep.subr.bf16.mxu0 0
        %1305 = vmatpush1.bf16.msra.mxu0 0
        %1306 = vmatprep.subr.bf16.mxu0 0
        %1307 = vmatpush1.bf16.msra.mxu0 0
        %1308 = vmatprep.subr.bf16.mxu0 0
        %1309 = vmatpush1.bf16.msra.mxu0 0
        %1310 = vmatprep.subr.bf16.mxu0 0
        %1311 = vmatpush1.bf16.msra.mxu0 0
        %1312 = vmatprep.subr.bf16.mxu0 0
        %1313 = vmatpush1.bf16.msra.mxu0 0
        %1314 = vmatprep.subr.bf16.mxu0 0
        %1315 = vmatpush1.bf16.msra.mxu0 0
        %1316 = vmatprep.subr.bf16.mxu0 0
        %1317 = vmatpush1.bf16.msra.mxu0 0
        %1318 = vmatprep.subr.bf16.mxu0 0
        %1319 = vmatpush1.bf16.msra.mxu0 0
        %1320 = vmatprep.subr.bf16.mxu0 0
        %1321 = vmatpush1.bf16.msra.mxu0 0
        %1322 = vmatprep.subr.bf16.mxu0 0
        %1323 = vmatpush1.bf16.msra.mxu0 0
        %1324 = vmatprep.subr.bf16.mxu0 0
        %1325 = vmatpush1.bf16.msra.mxu0 0
        %1326 = vmatprep.subr.bf16.mxu0 0
        %1327 = vmatpush1.bf16.msra.mxu0 0
        %1328 = vmatprep.subr.bf16.mxu0 0
        %1329 = vmatpush1.bf16.msra.mxu0 0
        %1330 = vmatprep.mubr.bf16.mxu0 0
        %1331 = vmatmul.mubr.bf16.gmra.mrb[0].mxu0 %v1293
        %v1332 = vpop.f32.mrb[0].mxu0
        %v1333 = vadd.f32 0.0, %v1332
        %v1334 = vpop.f32.mrb[0].mxu0
        %v1335 = vpop.f32.mrb[0].mxu0
        %v1336 = vpop.f32.mrb[0].mxu0
        %1337 = vdwg.mxu0
        %1338 = vrot.lane.b32.xlu0 %v706, 48
        %v1339 = vpop.permute.xlu0 %1338
        %v1341 = vsel %vm710, %v1289, 0
        %v1344 = vsel %vm837, %v1339, 0
        %1346 = vmatprep.subr.bf16.mxu0 0
        %1347 = vmatpush1.bf16.msra.mxu0 %v1344
        %1348 = vmatprep.subr.bf16.mxu0 0
        %1349 = vmatpush1.bf16.msra.mxu0 0
        %1350 = vmatprep.subr.bf16.mxu0 0
        %1351 = vmatpush1.bf16.msra.mxu0 0
        %1352 = vmatprep.subr.bf16.mxu0 0
        %1353 = vmatpush1.bf16.msra.mxu0 0
        %1354 = vmatprep.subr.bf16.mxu0 0
        %1355 = vmatpush1.bf16.msra.mxu0 0
        %1356 = vmatprep.subr.bf16.mxu0 0
        %1357 = vmatpush1.bf16.msra.mxu0 0
        %1358 = vmatprep.subr.bf16.mxu0 0
        %1359 = vmatpush1.bf16.msra.mxu0 0
        %1360 = vmatprep.subr.bf16.mxu0 0
        %1361 = vmatpush1.bf16.msra.mxu0 0
        %1362 = vmatprep.subr.bf16.mxu0 0
        %1363 = vmatpush1.bf16.msra.mxu0 0
        %1364 = vmatprep.subr.bf16.mxu0 0
        %1365 = vmatpush1.bf16.msra.mxu0 0
        %1366 = vmatprep.subr.bf16.mxu0 0
        %1367 = vmatpush1.bf16.msra.mxu0 0
        %1368 = vmatprep.subr.bf16.mxu0 0
        %1369 = vmatpush1.bf16.msra.mxu0 0
        %1370 = vmatprep.subr.bf16.mxu0 0
        %1371 = vmatpush1.bf16.msra.mxu0 0
        %1372 = vmatprep.subr.bf16.mxu0 0
        %1373 = vmatpush1.bf16.msra.mxu0 0
        %1374 = vmatprep.subr.bf16.mxu0 0
        %1375 = vmatpush1.bf16.msra.mxu0 0
        %1376 = vmatprep.subr.bf16.mxu0 0
        %1377 = vmatpush1.bf16.msra.mxu0 0
        %1378 = vmatprep.mubr.bf16.mxu0 0
        %1379 = vmatmul.mubr.bf16.gmra.mrb[0].mxu0 %v1341
        %v1380 = vpop.f32.mrb[0].mxu0
        %v1381 = vadd.f32 0.0, %v1380
        %v1382 = vpop.f32.mrb[0].mxu0
        %v1383 = vpop.f32.mrb[0].mxu0
        %v1384 = vpop.f32.mrb[0].mxu0
        %1385 = vdwg.mxu0
        %1388 = vrot.lane.b32.xlu0 %v1333, 16
        %v1389 = vpop.permute.xlu0 %1388
        %1390 = vrot.lane.b32.xlu0 %v1381, 16
        %v1391 = vpop.permute.xlu0 %1390
        %vm1394 = vcmask 195712
        %1395 = vst.msk [vmem:[#allocation2] sm:$0xff] %vm1394, %v1389
        %1396 = vst.msk [vmem:[#allocation2 + $0x8] sm:$0xff] %vm1394, %v1391
        %1397 = vrot.lane.b32.xlu0 %v705, 104
        %v1398 = vpop.permute.xlu0 %1397
        %1399 = vrot.lane.b32.xlu0 %v705, 72
        %v1400 = vpop.permute.xlu0 %1399
        %v1402 = vsel %vm710, %v1398, 0
        %v1405 = vsel %vm710, %v1400, 0
        %1407 = vmatprep.subr.bf16.mxu0 0
        %1408 = vmatpush1.bf16.xpose.msra.mxu0 %v1405
        %1409 = vmatprep.subr.bf16.mxu0 0
        %1410 = vmatpush1.bf16.xpose.msra.mxu0 0
        %1411 = vmatprep.subr.bf16.mxu0 0
        %1412 = vmatpush1.bf16.xpose.msra.mxu0 0
        %1413 = vmatprep.subr.bf16.mxu0 0
        %1414 = vmatpush1.bf16.xpose.msra.mxu0 0
        %1415 = vmatprep.subr.bf16.mxu0 0
        %1416 = vmatpush1.bf16.xpose.msra.mxu0 0
        %1417 = vmatprep.subr.bf16.mxu0 0
        %1418 = vmatpush1.bf16.xpose.msra.mxu0 0
        %1419 = vmatprep.subr.bf16.mxu0 0
        %1420 = vmatpush1.bf16.xpose.msra.mxu0 0
        %1421 = vmatprep.subr.bf16.mxu0 0
        %1422 = vmatpush1.bf16.xpose.msra.mxu0 0
        %1423 = vmatprep.subr.bf16.mxu0 0
        %1424 = vmatpush1.bf16.xpose.msra.mxu0 0
        %1425 = vmatprep.subr.bf16.mxu0 0
        %1426 = vmatpush1.bf16.xpose.msra.mxu0 0
        %1427 = vmatprep.subr.bf16.mxu0 0
        %1428 = vmatpush1.bf16.xpose.msra.mxu0 0
        %1429 = vmatprep.subr.bf16.mxu0 0
        %1430 = vmatpush1.bf16.xpose.msra.mxu0 0
        %1431 = vmatprep.subr.bf16.mxu0 0
        %1432 = vmatpush1.bf16.xpose.msra.mxu0 0
        %1433 = vmatprep.subr.bf16.mxu0 0
        %1434 = vmatpush1.bf16.xpose.msra.mxu0 0
        %1435 = vmatprep.subr.bf16.mxu0 0
        %1436 = vmatpush1.bf16.xpose.msra.mxu0 0
        %1437 = vmatprep.subr.bf16.mxu0 0
        %1438 = vmatpush1.bf16.xpose.msra.mxu0 0
        %1439 = vmatprep.mubr.bf16.mxu0 0
        %1440 = vmatmul.mubr.bf16.gmra.mrb[0].mxu0 %v1402
        %v1441 = vpop.f32.mrb[0].mxu0
        %v1442 = vadd.f32 0.0, %v1441
        %v1443 = vpop.f32.mrb[0].mxu0
        %v1444 = vpop.f32.mrb[0].mxu0
        %v1445 = vpop.f32.mrb[0].mxu0
        %1446 = vdwg.mxu0
        %1447 = vrot.lane.b32.xlu0 %v706, 104
        %v1448 = vpop.permute.xlu0 %1447
        %1449 = vrot.lane.b32.xlu0 %v706, 72
        %v1450 = vpop.permute.xlu0 %1449
        %v1452 = vsel %vm710, %v1448, 0
        %v1455 = vsel %vm710, %v1450, 0
        %1457 = vmatprep.subr.bf16.mxu0 0
        %1458 = vmatpush1.bf16.xpose.msra.mxu0 %v1455
        %1459 = vmatprep.subr.bf16.mxu0 0
        %1460 = vmatpush1.bf16.xpose.msra.mxu0 0
        %1461 = vmatprep.subr.bf16.mxu0 0
        %1462 = vmatpush1.bf16.xpose.msra.mxu0 0
        %1463 = vmatprep.subr.bf16.mxu0 0
        %1464 = vmatpush1.bf16.xpose.msra.mxu0 0
        %1465 = vmatprep.subr.bf16.mxu0 0
        %1466 = vmatpush1.bf16.xpose.msra.mxu0 0
        %1467 = vmatprep.subr.bf16.mxu0 0
        %1468 = vmatpush1.bf16.xpose.msra.mxu0 0
        %1469 = vmatprep.subr.bf16.mxu0 0
        %1470 = vmatpush1.bf16.xpose.msra.mxu0 0
        %1471 = vmatprep.subr.bf16.mxu0 0
        %1472 = vmatpush1.bf16.xpose.msra.mxu0 0
        %1473 = vmatprep.subr.bf16.mxu0 0
        %1474 = vmatpush1.bf16.xpose.msra.mxu0 0
        %1475 = vmatprep.subr.bf16.mxu0 0
        %1476 = vmatpush1.bf16.xpose.msra.mxu0 0
        %1477 = vmatprep.subr.bf16.mxu0 0
        %1478 = vmatpush1.bf16.xpose.msra.mxu0 0
        %1479 = vmatprep.subr.bf16.mxu0 0
        %1480 = vmatpush1.bf16.xpose.msra.mxu0 0
        %1481 = vmatprep.subr.bf16.mxu0 0
        %1482 = vmatpush1.bf16.xpose.msra.mxu0 0
        %1483 = vmatprep.subr.bf16.mxu0 0
        %1484 = vmatpush1.bf16.xpose.msra.mxu0 0
        %1485 = vmatprep.subr.bf16.mxu0 0
        %1486 = vmatpush1.bf16.xpose.msra.mxu0 0
        %1487 = vmatprep.subr.bf16.mxu0 0
        %1488 = vmatpush1.bf16.xpose.msra.mxu0 0
        %1489 = vmatprep.mubr.bf16.mxu0 0
        %1490 = vmatmul.mubr.bf16.gmra.mrb[0].mxu0 %v1452
        %v1491 = vpop.f32.mrb[0].mxu0
        %v1492 = vadd.f32 0.0, %v1491
        %v1493 = vpop.f32.mrb[0].mxu0
        %v1494 = vpop.f32.mrb[0].mxu0
        %v1495 = vpop.f32.mrb[0].mxu0
        %1496 = vdwg.mxu0
        %v1497 = vmul.f32 %v1442, 0.35355338
        %v1498 = vmul.f32 %v1492, 0.35355338
        %v1499 = vsel %vm710, %v1497, -inf
        %1500 = vmax.xlane.f32.xlu0 %v1499
        %v1501 = vpop.xlane.xlu0 %1500
        %v1502 = vsel %vm710, %v1498, -inf
        %1503 = vmax.xlane.f32.xlu0 %v1502
        %v1504 = vpop.xlane.xlu0 %1503
        %v1505 = vsub.f32 %v1497, %v1501
        %v1506 = vsub.f32 %v1498, %v1504
        %v1507 = vmul.f32 %v1505, 1.442695
        %v1508 = vpow.pop %v1507
        %v1509 = vmul.f32 %v1506, 1.442695
        %v1510 = vpow.pop %v1509
        %v1511 = vsel %vm710, %v1508, 0.0
        %1512 = vadd.xlane.f32.xlu0 %v1511
        %v1513 = vpop.xlane.xlu0 %1512
        %v1514 = vsel %vm710, %v1510, 0.0
        %1515 = vadd.xlane.f32.xlu0 %v1514
        %v1516 = vpop.xlane.xlu0 %1515
        %v1517 = vrcp.pop %v1513
        %v1518 = vrcp.pop %v1516
        %v1519 = vmul.f32 %v1508, %v1517
        %v1520 = vmul.f32 %v1510, %v1518
        %v1521 = vpack.c.bf16 %v1519, %v1519
        %v1522 = vpack.c.bf16 %v1520, %v1520
        %1523 = vrot.lane.b32.xlu0 %v705, 40
        %v1524 = vpop.permute.xlu0 %1523
        %v1526 = vsel %vm710, %v1521, 0
        %v1529 = vsel %vm837, %v1524, 0
        %1531 = vmatprep.subr.bf16.mxu0 0
        %1532 = vmatpush1.bf16.msra.mxu0 %v1529
        %1533 = vmatprep.subr.bf16.mxu0 0
        %1534 = vmatpush1.bf16.msra.mxu0 0
        %1535 = vmatprep.subr.bf16.mxu0 0
        %1536 = vmatpush1.bf16.msra.mxu0 0
        %1537 = vmatprep.subr.bf16.mxu0 0
        %1538 = vmatpush1.bf16.msra.mxu0 0
        %1539 = vmatprep.subr.bf16.mxu0 0
        %1540 = vmatpush1.bf16.msra.mxu0 0
        %1541 = vmatprep.subr.bf16.mxu0 0
        %1542 = vmatpush1.bf16.msra.mxu0 0
        %1543 = vmatprep.subr.bf16.mxu0 0
        %1544 = vmatpush1.bf16.msra.mxu0 0
        %1545 = vmatprep.subr.bf16.mxu0 0
        %1546 = vmatpush1.bf16.msra.mxu0 0
        %1547 = vmatprep.subr.bf16.mxu0 0
        %1548 = vmatpush1.bf16.msra.mxu0 0
        %1549 = vmatprep.subr.bf16.mxu0 0
        %1550 = vmatpush1.bf16.msra.mxu0 0
        %1551 = vmatprep.subr.bf16.mxu0 0
        %1552 = vmatpush1.bf16.msra.mxu0 0
        %1553 = vmatprep.subr.bf16.mxu0 0
        %1554 = vmatpush1.bf16.msra.mxu0 0
        %1555 = vmatprep.subr.bf16.mxu0 0
        %1556 = vmatpush1.bf16.msra.mxu0 0
        %1557 = vmatprep.subr.bf16.mxu0 0
        %1558 = vmatpush1.bf16.msra.mxu0 0
        %1559 = vmatprep.subr.bf16.mxu0 0
        %1560 = vmatpush1.bf16.msra.mxu0 0
        %1561 = vmatprep.subr.bf16.mxu0 0
        %1562 = vmatpush1.bf16.msra.mxu0 0
        %1563 = vmatprep.mubr.bf16.mxu0 0
        %1564 = vmatmul.mubr.bf16.gmra.mrb[0].mxu0 %v1526
        %v1565 = vpop.f32.mrb[0].mxu0
        %v1566 = vadd.f32 0.0, %v1565
        %v1567 = vpop.f32.mrb[0].mxu0
        %v1568 = vpop.f32.mrb[0].mxu0
        %v1569 = vpop.f32.mrb[0].mxu0
        %1570 = vdwg.mxu0
        %1571 = vrot.lane.b32.xlu0 %v706, 40
        %v1572 = vpop.permute.xlu0 %1571
        %v1574 = vsel %vm710, %v1522, 0
        %v1577 = vsel %vm837, %v1572, 0
        %1579 = vmatprep.subr.bf16.mxu0 0
        %1580 = vmatpush1.bf16.msra.mxu0 %v1577
        %1581 = vmatprep.subr.bf16.mxu0 0
        %1582 = vmatpush1.bf16.msra.mxu0 0
        %1583 = vmatprep.subr.bf16.mxu0 0
        %1584 = vmatpush1.bf16.msra.mxu0 0
        %1585 = vmatprep.subr.bf16.mxu0 0
        %1586 = vmatpush1.bf16.msra.mxu0 0
        %1587 = vmatprep.subr.bf16.mxu0 0
        %1588 = vmatpush1.bf16.msra.mxu0 0
        %1589 = vmatprep.subr.bf16.mxu0 0
        %1590 = vmatpush1.bf16.msra.mxu0 0
        %1591 = vmatprep.subr.bf16.mxu0 0
        %1592 = vmatpush1.bf16.msra.mxu0 0
        %1593 = vmatprep.subr.bf16.mxu0 0
        %1594 = vmatpush1.bf16.msra.mxu0 0
        %1595 = vmatprep.subr.bf16.mxu0 0
        %1596 = vmatpush1.bf16.msra.mxu0 0
        %1597 = vmatprep.subr.bf16.mxu0 0
        %1598 = vmatpush1.bf16.msra.mxu0 0
        %1599 = vmatprep.subr.bf16.mxu0 0
        %1600 = vmatpush1.bf16.msra.mxu0 0
        %1601 = vmatprep.subr.bf16.mxu0 0
        %1602 = vmatpush1.bf16.msra.mxu0 0
        %1603 = vmatprep.subr.bf16.mxu0 0
        %1604 = vmatpush1.bf16.msra.mxu0 0
        %1605 = vmatprep.subr.bf16.mxu0 0
        %1606 = vmatpush1.bf16.msra.mxu0 0
        %1607 = vmatprep.subr.bf16.mxu0 0
        %1608 = vmatpush1.bf16.msra.mxu0 0
        %1609 = vmatprep.subr.bf16.mxu0 0
        %1610 = vmatpush1.bf16.msra.mxu0 0
        %1611 = vmatprep.mubr.bf16.mxu0 0
        %1612 = vmatmul.mubr.bf16.gmra.mrb[0].mxu0 %v1574
        %v1613 = vpop.f32.mrb[0].mxu0
        %v1614 = vadd.f32 0.0, %v1613
        %v1615 = vpop.f32.mrb[0].mxu0
        %v1616 = vpop.f32.mrb[0].mxu0
        %v1617 = vpop.f32.mrb[0].mxu0
        %1618 = vdwg.mxu0
        %1621 = vrot.lane.b32.xlu0 %v1566, 24
        %v1622 = vpop.permute.xlu0 %1621
        %1623 = vrot.lane.b32.xlu0 %v1614, 24
        %v1624 = vpop.permute.xlu0 %1623
        %vm1627 = vcmask 261312
        %1628 = vst.msk [vmem:[#allocation2] sm:$0xff] %vm1627, %v1622
        %1629 = vst.msk [vmem:[#allocation2 + $0x8] sm:$0xff] %vm1627, %v1624
        %v1630 = vld [vmem:[#allocation2] sm:$0xff]
        %v1631 = vld [vmem:[#allocation2 + $0x8] sm:$0xff]
        %v1632 = vpack.c.bf16 %v1631, %v1630
        %v1633 = vld [vmem:[%s521] sm:$0xf]
        %v1634 = vld [vmem:[%s521 + $0x4] sm:$0xf]
        %v1635 = vld [vmem:[%s521 + $0x8] sm:$0xf]
        %v1636 = vld [vmem:[%s521 + $0xc] sm:$0xf]
        %v1637 = vld [vmem:[%s605] sm:$0x1]
        %v1639 = vlaneseq
        %v1640 = vshrl.u32 %v1639, 7
        %v1641 = vsub.s32 0, %v1640
        %v1642 = vrot.slane %v1637, %v1641
        %v1648 = vunpack.c.l.b16 %v1633
        %v1649 = vunpack.c.l.b16 %v1634
        %v1650 = vunpack.c.l.b16 %v1635
        %v1651 = vunpack.c.l.b16 %v1636
        %v1652 = vpack.c.b16 %v1649, %v1648
        %v1653 = vpack.c.b16 %v1651, %v1650
        %v1657 = vsel %vm660, %v1632, 0
        %1659 = vmatprep.subr.bf16.mxu0 0
        %1660 = vmatpush1.bf16.msra.mxu0 %v1652
        %1661 = vmatprep.subr.bf16.mxu0 0
        %1662 = vmatpush1.bf16.msra.mxu0 %v1653
        %1663 = vmatprep.subr.bf16.mxu0 0
        %1664 = vmatpush1.bf16.msra.mxu0 0
        %1665 = vmatprep.subr.bf16.mxu0 0
        %1666 = vmatpush1.bf16.msra.mxu0 0
        %1667 = vmatprep.subr.bf16.mxu0 0
        %1668 = vmatpush1.bf16.msra.mxu0 0
        %1669 = vmatprep.subr.bf16.mxu0 0
        %1670 = vmatpush1.bf16.msra.mxu0 0
        %1671 = vmatprep.subr.bf16.mxu0 0
        %1672 = vmatpush1.bf16.msra.mxu0 0
        %1673 = vmatprep.subr.bf16.mxu0 0
        %1674 = vmatpush1.bf16.msra.mxu0 0
        %1675 = vmatprep.subr.bf16.mxu0 0
        %1676 = vmatpush1.bf16.msra.mxu0 0
        %1677 = vmatprep.subr.bf16.mxu0 0
        %1678 = vmatpush1.bf16.msra.mxu0 0
        %1679 = vmatprep.subr.bf16.mxu0 0
        %1680 = vmatpush1.bf16.msra.mxu0 0
        %1681 = vmatprep.subr.bf16.mxu0 0
        %1682 = vmatpush1.bf16.msra.mxu0 0
        %1683 = vmatprep.subr.bf16.mxu0 0
        %1684 = vmatpush1.bf16.msra.mxu0 0
        %1685 = vmatprep.subr.bf16.mxu0 0
        %1686 = vmatpush1.bf16.msra.mxu0 0
        %1687 = vmatprep.subr.bf16.mxu0 0
        %1688 = vmatpush1.bf16.msra.mxu0 0
        %1689 = vmatprep.subr.bf16.mxu0 0
        %1690 = vmatpush1.bf16.msra.mxu0 0
        %1691 = vmatprep.mubr.bf16.mxu0 0
        %1692 = vmatmul.mubr.bf16.gmra.mrb[0].mxu0 %v1657
        %v1693 = vpop.f32.mrb[0].mxu0
        %v1694 = vadd.f32 %v1642, %v1693
        %v1695 = vpop.f32.mrb[0].mxu0
        %v1696 = vpop.f32.mrb[0].mxu0
        %v1697 = vadd.f32 %v1642, %v1696
        %v1698 = vpop.f32.mrb[0].mxu0
        %1699 = vdwg.mxu0
        %v1700 = vadd.f32 %v634, %v1694
        %v1701 = vadd.f32 %v635, %v1697
        %v1702 = vsel %vm660, %v1700, 0.0
        %1703 = vadd.xlane.f32.xlu0 %v1702
        %v1704 = vpop.xlane.xlu0 %1703
        %v1705 = vsel %vm660, %v1701, 0.0
        %1706 = vadd.xlane.f32.xlu0 %v1705
        %v1707 = vpop.xlane.xlu0 %1706
        %v1708 = vrcp.pop 32.0
        %v1709 = vmul.f32 %v1704, %v1708
        %v1710 = vmul.f32 %v1707, %v1708
        %v1711 = vsub.f32 %v1700, %v1709
        %v1712 = vsub.f32 %v1701, %v1710
        %v1713 = vmul.f32 %v1711, %v1711
        %v1714 = vmul.f32 %v1712, %v1712
        %v1715 = vsel %vm660, %v1713, 0.0
        %1716 = vadd.xlane.f32.xlu0 %v1715
        %v1717 = vpop.xlane.xlu0 %1716
        %v1718 = vsel %vm660, %v1714, 0.0
        %1719 = vadd.xlane.f32.xlu0 %v1718
        %v1720 = vpop.xlane.xlu0 %1719
        %v1721 = vmul.f32 %v1717, %v1708
        %v1722 = vmul.f32 %v1720, %v1708
        %v1723 = vadd.f32 %v1721, 1e-05
        %v1724 = vadd.f32 %v1722, 1e-05
        %v1725 = vrsqrt.pop %v1723
        %v1726 = vrsqrt.pop %v1724
        %v1727 = vmul.f32 %v1711, %v1725
        %v1728 = vmul.f32 %v1712, %v1726
        %v1729 = vld [vmem:[%s608] sm:$0x1]
        %v1731 = vlaneseq
        %v1732 = vshrl.u32 %v1731, 7
        %v1733 = vsub.s32 0, %v1732
        %v1734 = vrot.slane %v1729, %v1733
        %v1736 = vmul.f32 %v1727, %v1734
        %v1737 = vmul.f32 %v1728, %v1734
        %v1738 = vld [vmem:[%s611] sm:$0x1]
        %v1740 = vlaneseq
        %v1741 = vshrl.u32 %v1740, 7
        %v1742 = vsub.s32 0, %v1741
        %v1743 = vrot.slane %v1738, %v1742
        %v1745 = vadd.f32 %v1736, %v1743
        %v1746 = vadd.f32 %v1737, %v1743
        %v1747 = vpack.c.bf16 %v1746, %v1745
        %v1748 = vld [vmem:[%s530] sm:$0xf]
        %v1749 = vld [vmem:[%s530 + $0x4] sm:$0xf]
        %v1750 = vld [vmem:[%s530 + $0x8] sm:$0xf]
        %v1751 = vld [vmem:[%s530 + $0xc] sm:$0xf]
        %v1752 = vld [vmem:[%s614] sm:$0x1]
        %v1754 = vlaneseq
        %v1755 = vshrl.u32 %v1754, 7
        %v1756 = vsub.s32 0, %v1755
        %v1757 = vrot.slane %v1752, %v1756
        %v1763 = vunpack.c.l.b16 %v1748
        %v1764 = vunpack.c.l.b16 %v1749
        %v1765 = vunpack.c.l.b16 %v1750
        %v1766 = vunpack.c.l.b16 %v1751
        %v1767 = vpack.c.b16 %v1764, %v1763
        %v1768 = vpack.c.b16 %v1766, %v1765
        %v1772 = vsel %vm660, %v1747, 0
        %1774 = vmatprep.subr.bf16.mxu0 0
        %1775 = vmatpush1.bf16.msra.mxu0 %v1767
        %1776 = vmatprep.subr.bf16.mxu0 0
        %1777 = vmatpush1.bf16.msra.mxu0 %v1768
        %1778 = vmatprep.subr.bf16.mxu0 0
        %1779 = vmatpush1.bf16.msra.mxu0 0
        %1780 = vmatprep.subr.bf16.mxu0 0
        %1781 = vmatpush1.bf16.msra.mxu0 0
        %1782 = vmatprep.subr.bf16.mxu0 0
        %1783 = vmatpush1.bf16.msra.mxu0 0
        %1784 = vmatprep.subr.bf16.mxu0 0
        %1785 = vmatpush1.bf16.msra.mxu0 0
        %1786 = vmatprep.subr.bf16.mxu0 0
        %1787 = vmatpush1.bf16.msra.mxu0 0
        %1788 = vmatprep.subr.bf16.mxu0 0
        %1789 = vmatpush1.bf16.msra.mxu0 0
        %1790 = vmatprep.subr.bf16.mxu0 0
        %1791 = vmatpush1.bf16.msra.mxu0 0
        %1792 = vmatprep.subr.bf16.mxu0 0
        %1793 = vmatpush1.bf16.msra.mxu0 0
        %1794 = vmatprep.subr.bf16.mxu0 0
        %1795 = vmatpush1.bf16.msra.mxu0 0
        %1796 = vmatprep.subr.bf16.mxu0 0
        %1797 = vmatpush1.bf16.msra.mxu0 0
        %1798 = vmatprep.subr.bf16.mxu0 0
        %1799 = vmatpush1.bf16.msra.mxu0 0
        %1800 = vmatprep.subr.bf16.mxu0 0
        %1801 = vmatpush1.bf16.msra.mxu0 0
        %1802 = vmatprep.subr.bf16.mxu0 0
        %1803 = vmatpush1.bf16.msra.mxu0 0
        %1804 = vmatprep.subr.bf16.mxu0 0
        %1805 = vmatpush1.bf16.msra.mxu0 0
        %1806 = vmatprep.mubr.bf16.mxu0 0
        %1807 = vmatmul.mubr.bf16.gmra.mrb[0].mxu0 %v1772
        %v1808 = vpop.f32.mrb[0].mxu0
        %v1809 = vadd.f32 %v1757, %v1808
        %v1810 = vpop.f32.mrb[0].mxu0
        %v1811 = vpop.f32.mrb[0].mxu0
        %v1812 = vadd.f32 %v1757, %v1811
        %v1813 = vpop.f32.mrb[0].mxu0
        %1814 = vdwg.mxu0
        %v1815 = vld [vmem:[%s617] sm:$0x1]
        %v1816 = vxor.u32 %v1815, 2147483648
        %v1817 = vmul.f32 %v1816, 1.442695
        %v1818 = vpow.pop %v1817
        %v1819 = vadd.f32 %v1818, 1.0
        %v1820 = vrcp.pop %v1819
        %v1821 = vmul.f32 1.0, %v1820
        %v1822 = vlaneseq
        %v1823 = vand.u32 %v1822, 127
        %v1824 = vmul.f32 %v1809, 0.5
        %v1825 = vmul.f32 %v1812, 0.5
        %v1826 = vmul.f32 %v1809, 0.70710677
        %v1827 = vmul.f32 %v1812, 0.70710677
        %v1828 = verf.f32.pop %v1826
        %v1829 = verf.f32.pop %v1827
        %v1830 = vadd.f32 %v1828, 1.0
        %v1831 = vadd.f32 %v1829, 1.0
        %v1832 = vmul.f32 %v1824, %v1830
        %v1833 = vmul.f32 %v1825, %v1831
        %vm1834 = vcmp.lt.s32.totalorder %v1823, 8
        %v1835 = vand.u32 2147483647, %v1809
        %vm1836 = vcmp.le.f32.partialorder %v1835, 0.7853982
        %vm1837 = vcmp.lt.s32.totalorder %v1809, 0
        %v1838 = vand.u32 %v1809, 2139095040
        %v1839 = vshrl.u32 %v1838, 23
        %v1840 = vsub.s32 %v1839, 127
        %v1841 = vand.u32 2147483647, %v1809
        %v1842 = vand.u32 %v1841, 8388607
        %v1843 = vor.u32 %v1842, 8388608
        %v1844 = vsub.s32 0, %v1843
        %v1845 = vadd.s32 %v1840, 1
        %vm1846 = vcmp.gt.s32.totalorder %v1845, 0
        %v1847 = vsel %vm1846, %v1845, 0
        %v1848 = vshrl.u32 %v1847, 5
        %v1849 = vand.u32 %v1847, 31
        %v1850 = vsub.s32 32, %v1849
        %v1851 = vshrl.u32 683565275, %v1850
        %v1852 = vshll.u32 683565275, %v1849
        %v1853 = vshrl.u32 2475754826, %v1850
        %v1854 = vor.u32 %v1852, %v1853
        %v1855 = vshll.u32 2475754826, %v1849
        %v1856 = vshrl.u32 2131351028, %v1850
        %v1857 = vor.u32 %v1855, %v1856
        %v1858 = vshll.u32 2131351028, %v1849
        %v1859 = vshrl.u32 2102212464, %v1850
        %v1860 = vor.u32 %v1858, %v1859
        %v1861 = vshll.u32 2102212464, %v1849
        %v1862 = vshrl.u32 920167782, %v1850
        %v1863 = vor.u32 %v1861, %v1862
        %v1864 = vshll.u32 920167782, %v1849
        %v1865 = vshrl.u32 1326507024, %v1850
        %v1866 = vor.u32 %v1864, %v1865
        %vm1867 = vcmp.lt.s32.totalorder %v1848, 1
        %vm1868 = vcmp.lt.s32.totalorder %v1848, 2
        %vm1869 = vcmp.lt.s32.totalorder %v1848, 3
        %vm1870 = vcmp.lt.s32.totalorder %v1848, 4
        %v1871 = vsel %vm1867, %v1851, %v1854
        %v1872 = vsel %vm1870, %v1860, 2102212464
        %v1873 = vsel %vm1869, %v1857, %v1872
        %v1874 = vsel %vm1868, %v1871, %v1873
        %v1875 = vsel %vm1867, %v1854, %v1857
        %v1876 = vsel %vm1870, %v1863, 920167782
        %v1877 = vsel %vm1869, %v1860, %v1876
        %v1878 = vsel %vm1868, %v1875, %v1877
        %v1879 = vsel %vm1867, %v1857, %v1860
        %v1880 = vsel %vm1870, %v1866, 1326507024
        %v1881 = vsel %vm1869, %v1863, %v1880
        %v1882 = vsel %vm1868, %v1879, %v1881
        %v1883 = vshll.u32 %v1843, 8
        %v1884 = vmul.u32.u64.compose %v1883, %v1882
        %v1885 = vextract.low.u32 %v1884
        %v1886 = vextract.high.u32 %v1884
        %v1887 = vmul.u32.u64.compose %v1883, %v1878
        %v1888 = vextract.low.u32 %v1887
        %v1889 = vextract.high.u32 %v1887
        %v1890 = vmul.u32 %v1883, %v1874
        %v1891 = vadd.s32 %v1886, %v1888
        %vm1892 = vc.u32 %v1886, %v1888
        %v1893 = vadd.s32 %v1889, 1
        %v1894 = vsel %vm1892, %v1893, %v1889
        %v1895 = vadd.s32 %v1890, %v1894
        %v1896 = vadd.s32 %v1895, 536870912
        %v1897 = vshrl.u32 %v1896, 30
        %v1898 = vshll.u32 %v1897, 30
        %v1899 = vsub.s32 %v1895, %v1898
        %vm1900 = vcmp.lt.s32.totalorder %v1899, 0
        %v1901 = vsub.s32 0, %v1899
        %v1902 = vsel %vm1900, %v1901, %v1899
        %v1903 = vclz %v1902
        %v1904 = vsub.s32 %v1903, 2
        %vm1905 = vcmp.gt.s32.totalorder 0, %v1904
        %v1906 = vsel %vm1905, 0, %v1904
        %v1907 = vsub.s32 32, %v1906
        %v1908 = vshll.u32 %v1899, %v1906
        %v1909 = vshrl.u32 %v1891, %v1907
        %v1910 = vor.u32 %v1908, %v1909
        %v1911 = vsub.s32 4294967266, %v1906
        %v1912 = vadd.s32 %v1911, 127
        %v1913 = vshll.u32 %v1912, 23
        %v1914 = vor.u32 4788187, %v1913
        %v1915 = vand.u32 2147483647, %v1914
        %v1917 = vcvt.s32.f32 %v1910
        %v1918 = vmul.f32 %v1917, %v1915
        %v1919 = vxor.u32 %v1918, 2147483648
        %v1920 = vsel %vm1837, %v1919, %v1918
        %v1921 = vsub.s32 4, %v1897
        %v1922 = vsel %vm1837, %v1921, %v1897
        %v1923 = vsel %vm1836, %v1809, %v1920
        %v1924 = vsel %vm1836, 0, %v1922
        %v1925 = vcosq.f32.pop %v1923
        %v1926 = vsinq.f32.pop %v1923
        %vm1927 = vweird.f32 %v1809
        %v1928 = vadd.s32 %v1924, 3
        %v1929 = vand.u32 %v1928, 3
        %vm1930 = vcmp.lt.s32.totalorder %v1929, 2
        %vm1931 = vcmp.eq.s32.totalorder %v1929, 0
        %v1932 = vxor.u32 %v1926, 2147483648
        %v1933 = vsel %vm1931, %v1925, %v1932
        %vm1934 = vcmp.eq.s32.totalorder %v1929, 2
        %v1935 = vxor.u32 %v1925, 2147483648
        %v1936 = vsel %vm1934, %v1935, %v1926
        %v1937 = vsel %vm1930, %v1933, %v1936
        %v1938 = vsel %vm1927, nan, %v1937
        %v1939 = vand.u32 2147483647, %v1812
        %vm1940 = vcmp.le.f32.partialorder %v1939, 0.7853982
        %vm1941 = vcmp.lt.s32.totalorder %v1812, 0
        %v1942 = vand.u32 %v1812, 2139095040
        %v1943 = vshrl.u32 %v1942, 23
        %v1944 = vsub.s32 %v1943, 127
        %v1945 = vand.u32 2147483647, %v1812
        %v1946 = vand.u32 %v1945, 8388607
        %v1947 = vor.u32 %v1946, 8388608
        %v1948 = vsub.s32 0, %v1947
        %v1949 = vadd.s32 %v1944, 1
        %vm1950 = vcmp.gt.s32.totalorder %v1949, 0
        %v1951 = vsel %vm1950, %v1949, 0
        %v1952 = vshrl.u32 %v1951, 5
        %v1953 = vand.u32 %v1951, 31
        %v1954 = vsub.s32 32, %v1953
        %v1955 = vshrl.u32 683565275, %v1954
        %v1956 = vshll.u32 683565275, %v1953
        %v1957 = vshrl.u32 2475754826, %v1954
        %v1958 = vor.u32 %v1956, %v1957
        %v1959 = vshll.u32 2475754826, %v1953
        %v1960 = vshrl.u32 2131351028, %v1954
        %v1961 = vor.u32 %v1959, %v1960
        %v1962 = vshll.u32 2131351028, %v1953
        %v1963 = vshrl.u32 2102212464, %v1954
        %v1964 = vor.u32 %v1962, %v1963
        %v1965 = vshll.u32 2102212464, %v1953
        %v1966 = vshrl.u32 920167782, %v1954
        %v1967 = vor.u32 %v1965, %v1966
        %v1968 = vshll.u32 920167782, %v1953
        %v1969 = vshrl.u32 1326507024, %v1954
        %v1970 = vor.u32 %v1968, %v1969
        %vm1971 = vcmp.lt.s32.totalorder %v1952, 1
        %vm1972 = vcmp.lt.s32.totalorder %v1952, 2
        %vm1973 = vcmp.lt.s32.totalorder %v1952, 3
        %vm1974 = vcmp.lt.s32.totalorder %v1952, 4
        %v1975 = vsel %vm1971, %v1955, %v1958
        %v1976 = vsel %vm1974, %v1964, 2102212464
        %v1977 = vsel %vm1973, %v1961, %v1976
        %v1978 = vsel %vm1972, %v1975, %v1977
        %v1979 = vsel %vm1971, %v1958, %v1961
        %v1980 = vsel %vm1974, %v1967, 920167782
        %v1981 = vsel %vm1973, %v1964, %v1980
        %v1982 = vsel %vm1972, %v1979, %v1981
        %v1983 = vsel %vm1971, %v1961, %v1964
        %v1984 = vsel %vm1974, %v1970, 1326507024
        %v1985 = vsel %vm1973, %v1967, %v1984
        %v1986 = vsel %vm1972, %v1983, %v1985
        %v1987 = vshll.u32 %v1947, 8
        %v1988 = vmul.u32.u64.compose %v1987, %v1986
        %v1989 = vextract.low.u32 %v1988
        %v1990 = vextract.high.u32 %v1988
        %v1991 = vmul.u32.u64.compose %v1987, %v1982
        %v1992 = vextract.low.u32 %v1991
        %v1993 = vextract.high.u32 %v1991
        %v1994 = vmul.u32 %v1987, %v1978
        %v1995 = vadd.s32 %v1990, %v1992
        %vm1996 = vc.u32 %v1990, %v1992
        %v1997 = vadd.s32 %v1993, 1
        %v1998 = vsel %vm1996, %v1997, %v1993
        %v1999 = vadd.s32 %v1994, %v1998
        %v2000 = vadd.s32 %v1999, 536870912
        %v2001 = vshrl.u32 %v2000, 30
        %v2002 = vshll.u32 %v2001, 30
        %v2003 = vsub.s32 %v1999, %v2002
        %vm2004 = vcmp.lt.s32.totalorder %v2003, 0
        %v2005 = vsub.s32 0, %v2003
        %v2006 = vsel %vm2004, %v2005, %v2003
        %v2007 = vclz %v2006
        %v2008 = vsub.s32 %v2007, 2
        %vm2009 = vcmp.gt.s32.totalorder 0, %v2008
        %v2010 = vsel %vm2009, 0, %v2008
        %v2011 = vsub.s32 32, %v2010
        %v2012 = vshll.u32 %v2003, %v2010
        %v2013 = vshrl.u32 %v1995, %v2011
        %v2014 = vor.u32 %v2012, %v2013
        %v2015 = vsub.s32 4294967266, %v2010
        %v2016 = vadd.s32 %v2015, 127
        %v2017 = vshll.u32 %v2016, 23
        %v2018 = vor.u32 4788187, %v2017
        %v2019 = vand.u32 2147483647, %v2018
        %v2021 = vcvt.s32.f32 %v2014
        %v2022 = vmul.f32 %v2021, %v2019
        %v2023 = vxor.u32 %v2022, 2147483648
        %v2024 = vsel %vm1941, %v2023, %v2022
        %v2025 = vsub.s32 4, %v2001
        %v2026 = vsel %vm1941, %v2025, %v2001
        %v2027 = vsel %vm1940, %v1812, %v2024
        %v2028 = vsel %vm1940, 0, %v2026
        %v2029 = vcosq.f32.pop %v2027
        %v2030 = vsinq.f32.pop %v2027
        %vm2031 = vweird.f32 %v1812
        %v2032 = vadd.s32 %v2028, 3
        %v2033 = vand.u32 %v2032, 3
        %vm2034 = vcmp.lt.s32.totalorder %v2033, 2
        %vm2035 = vcmp.eq.s32.totalorder %v2033, 0
        %v2036 = vxor.u32 %v2030, 2147483648
        %v2037 = vsel %vm2035, %v2029, %v2036
        %vm2038 = vcmp.eq.s32.totalorder %v2033, 2
        %v2039 = vxor.u32 %v2029, 2147483648
        %v2040 = vsel %vm2038, %v2039, %v2030
        %v2041 = vsel %vm2034, %v2037, %v2040
        %v2042 = vsel %vm2031, nan, %v2041
        %v2044 = vlaneseq
        %v2045 = vshrl.u32 %v2044, 7
        %v2046 = vsub.s32 0, %v2045
        %v2047 = vrot.slane %v1821, %v2046
        %2048 = vset.pattern.permute.xlu0 0
        %2049 = vperm.xlu0 %2048, %v2047
        %v2050 = vpop.permute.xlu0 %2049
        %v2052 = vmul.f32 %v2050, %v1938
        %v2053 = vmul.f32 %v2050, %v2042
        %vm2054 = vcmp.lt.s32.totalorder %v1823, 16
        %v2055 = vand.u32 2147483647, %v1809
        %vm2056 = vcmp.le.f32.partialorder %v2055, 0.7853982
        %vm2057 = vcmp.lt.s32.totalorder %v1809, 0
        %v2058 = vand.u32 %v1809, 2139095040
        %v2059 = vshrl.u32 %v2058, 23
        %v2060 = vsub.s32 %v2059, 127
        %v2061 = vand.u32 2147483647, %v1809
        %v2062 = vand.u32 %v2061, 8388607
        %v2063 = vor.u32 %v2062, 8388608
        %v2064 = vsub.s32 0, %v2063
        %v2065 = vadd.s32 %v2060, 1
        %vm2066 = vcmp.gt.s32.totalorder %v2065, 0
        %v2067 = vsel %vm2066, %v2065, 0
        %v2068 = vshrl.u32 %v2067, 5
        %v2069 = vand.u32 %v2067, 31
        %v2070 = vsub.s32 32, %v2069
        %v2071 = vshrl.u32 683565275, %v2070
        %v2072 = vshll.u32 683565275, %v2069
        %v2073 = vshrl.u32 2475754826, %v2070
        %v2074 = vor.u32 %v2072, %v2073
        %v2075 = vshll.u32 2475754826, %v2069
        %v2076 = vshrl.u32 2131351028, %v2070
        %v2077 = vor.u32 %v2075, %v2076
        %v2078 = vshll.u32 2131351028, %v2069
        %v2079 = vshrl.u32 2102212464, %v2070
        %v2080 = vor.u32 %v2078, %v2079
        %v2081 = vshll.u32 2102212464, %v2069
        %v2082 = vshrl.u32 920167782, %v2070
        %v2083 = vor.u32 %v2081, %v2082
        %v2084 = vshll.u32 920167782, %v2069
        %v2085 = vshrl.u32 1326507024, %v2070
        %v2086 = vor.u32 %v2084, %v2085
        %vm2087 = vcmp.lt.s32.totalorder %v2068, 1
        %vm2088 = vcmp.lt.s32.totalorder %v2068, 2
        %vm2089 = vcmp.lt.s32.totalorder %v2068, 3
        %vm2090 = vcmp.lt.s32.totalorder %v2068, 4
        %v2091 = vsel %vm2087, %v2071, %v2074
        %v2092 = vsel %vm2090, %v2080, 2102212464
        %v2093 = vsel %vm2089, %v2077, %v2092
        %v2094 = vsel %vm2088, %v2091, %v2093
        %v2095 = vsel %vm2087, %v2074, %v2077
        %v2096 = vsel %vm2090, %v2083, 920167782
        %v2097 = vsel %vm2089, %v2080, %v2096
        %v2098 = vsel %vm2088, %v2095, %v2097
        %v2099 = vsel %vm2087, %v2077, %v2080
        %v2100 = vsel %vm2090, %v2086, 1326507024
        %v2101 = vsel %vm2089, %v2083, %v2100
        %v2102 = vsel %vm2088, %v2099, %v2101
        %v2103 = vshll.u32 %v2063, 8
        %v2104 = vmul.u32.u64.compose %v2103, %v2102
        %v2105 = vextract.low.u32 %v2104
        %v2106 = vextract.high.u32 %v2104
        %v2107 = vmul.u32.u64.compose %v2103, %v2098
        %v2108 = vextract.low.u32 %v2107
        %v2109 = vextract.high.u32 %v2107
        %v2110 = vmul.u32 %v2103, %v2094
        %v2111 = vadd.s32 %v2106, %v2108
        %vm2112 = vc.u32 %v2106, %v2108
        %v2113 = vadd.s32 %v2109, 1
        %v2114 = vsel %vm2112, %v2113, %v2109
        %v2115 = vadd.s32 %v2110, %v2114
        %v2116 = vadd.s32 %v2115, 536870912
        %v2117 = vshrl.u32 %v2116, 30
        %v2118 = vshll.u32 %v2117, 30
        %v2119 = vsub.s32 %v2115, %v2118
        %vm2120 = vcmp.lt.s32.totalorder %v2119, 0
        %v2121 = vsub.s32 0, %v2119
        %v2122 = vsel %vm2120, %v2121, %v2119
        %v2123 = vclz %v2122
        %v2124 = vsub.s32 %v2123, 2
        %vm2125 = vcmp.gt.s32.totalorder 0, %v2124
        %v2126 = vsel %vm2125, 0, %v2124
        %v2127 = vsub.s32 32, %v2126
        %v2128 = vshll.u32 %v2119, %v2126
        %v2129 = vshrl.u32 %v2111, %v2127
        %v2130 = vor.u32 %v2128, %v2129
        %v2131 = vsub.s32 4294967266, %v2126
        %v2132 = vadd.s32 %v2131, 127
        %v2133 = vshll.u32 %v2132, 23
        %v2134 = vor.u32 4788187, %v2133
        %v2135 = vand.u32 2147483647, %v2134
        %v2137 = vcvt.s32.f32 %v2130
        %v2138 = vmul.f32 %v2137, %v2135
        %v2139 = vxor.u32 %v2138, 2147483648
        %v2140 = vsel %vm2057, %v2139, %v2138
        %v2141 = vsub.s32 4, %v2117
        %v2142 = vsel %vm2057, %v2141, %v2117
        %v2143 = vsel %vm2056, %v1809, %v2140
        %v2144 = vsel %vm2056, 0, %v2142
        %v2145 = vcosq.f32.pop %v2143
        %v2146 = vsinq.f32.pop %v2143
        %vm2147 = vweird.f32 %v1809
        %v2148 = vand.u32 %v2144, 3
        %vm2149 = vcmp.lt.s32.totalorder %v2148, 2
        %vm2150 = vcmp.eq.s32.totalorder %v2148, 0
        %v2151 = vxor.u32 %v2146, 2147483648
        %v2152 = vsel %vm2150, %v2145, %v2151
        %vm2153 = vcmp.eq.s32.totalorder %v2148, 2
        %v2154 = vxor.u32 %v2145, 2147483648
        %v2155 = vsel %vm2153, %v2154, %v2146
        %v2156 = vsel %vm2149, %v2152, %v2155
        %v2157 = vsel %vm2147, nan, %v2156
        %v2158 = vand.u32 2147483647, %v1812
        %vm2159 = vcmp.le.f32.partialorder %v2158, 0.7853982
        %vm2160 = vcmp.lt.s32.totalorder %v1812, 0
        %v2161 = vand.u32 %v1812, 2139095040
        %v2162 = vshrl.u32 %v2161, 23
        %v2163 = vsub.s32 %v2162, 127
        %v2164 = vand.u32 2147483647, %v1812
        %v2165 = vand.u32 %v2164, 8388607
        %v2166 = vor.u32 %v2165, 8388608
        %v2167 = vsub.s32 0, %v2166
        %v2168 = vadd.s32 %v2163, 1
        %vm2169 = vcmp.gt.s32.totalorder %v2168, 0
        %v2170 = vsel %vm2169, %v2168, 0
        %v2171 = vshrl.u32 %v2170, 5
        %v2172 = vand.u32 %v2170, 31
        %v2173 = vsub.s32 32, %v2172
        %v2174 = vshrl.u32 683565275, %v2173
        %v2175 = vshll.u32 683565275, %v2172
        %v2176 = vshrl.u32 2475754826, %v2173
        %v2177 = vor.u32 %v2175, %v2176
        %v2178 = vshll.u32 2475754826, %v2172
        %v2179 = vshrl.u32 2131351028, %v2173
        %v2180 = vor.u32 %v2178, %v2179
        %v2181 = vshll.u32 2131351028, %v2172
        %v2182 = vshrl.u32 2102212464, %v2173
        %v2183 = vor.u32 %v2181, %v2182
        %v2184 = vshll.u32 2102212464, %v2172
        %v2185 = vshrl.u32 920167782, %v2173
        %v2186 = vor.u32 %v2184, %v2185
        %v2187 = vshll.u32 920167782, %v2172
        %v2188 = vshrl.u32 1326507024, %v2173
        %v2189 = vor.u32 %v2187, %v2188
        %vm2190 = vcmp.lt.s32.totalorder %v2171, 1
        %vm2191 = vcmp.lt.s32.totalorder %v2171, 2
        %vm2192 = vcmp.lt.s32.totalorder %v2171, 3
        %vm2193 = vcmp.lt.s32.totalorder %v2171, 4
        %v2194 = vsel %vm2190, %v2174, %v2177
        %v2195 = vsel %vm2193, %v2183, 2102212464
        %v2196 = vsel %vm2192, %v2180, %v2195
        %v2197 = vsel %vm2191, %v2194, %v2196
        %v2198 = vsel %vm2190, %v2177, %v2180
        %v2199 = vsel %vm2193, %v2186, 920167782
        %v2200 = vsel %vm2192, %v2183, %v2199
        %v2201 = vsel %vm2191, %v2198, %v2200
        %v2202 = vsel %vm2190, %v2180, %v2183
        %v2203 = vsel %vm2193, %v2189, 1326507024
        %v2204 = vsel %vm2192, %v2186, %v2203
        %v2205 = vsel %vm2191, %v2202, %v2204
        %v2206 = vshll.u32 %v2166, 8
        %v2207 = vmul.u32.u64.compose %v2206, %v2205
        %v2208 = vextract.low.u32 %v2207
        %v2209 = vextract.high.u32 %v2207
        %v2210 = vmul.u32.u64.compose %v2206, %v2201
        %v2211 = vextract.low.u32 %v2210
        %v2212 = vextract.high.u32 %v2210
        %v2213 = vmul.u32 %v2206, %v2197
        %v2214 = vadd.s32 %v2209, %v2211
        %vm2215 = vc.u32 %v2209, %v2211
        %v2216 = vadd.s32 %v2212, 1
        %v2217 = vsel %vm2215, %v2216, %v2212
        %v2218 = vadd.s32 %v2213, %v2217
        %v2219 = vadd.s32 %v2218, 536870912
        %v2220 = vshrl.u32 %v2219, 30
        %v2221 = vshll.u32 %v2220, 30
        %v2222 = vsub.s32 %v2218, %v2221
        %vm2223 = vcmp.lt.s32.totalorder %v2222, 0
        %v2224 = vsub.s32 0, %v2222
        %v2225 = vsel %vm2223, %v2224, %v2222
        %v2226 = vclz %v2225
        %v2227 = vsub.s32 %v2226, 2
        %vm2228 = vcmp.gt.s32.totalorder 0, %v2227
        %v2229 = vsel %vm2228, 0, %v2227
        %v2230 = vsub.s32 32, %v2229
        %v2231 = vshll.u32 %v2222, %v2229
        %v2232 = vshrl.u32 %v2214, %v2230
        %v2233 = vor.u32 %v2231, %v2232
        %v2234 = vsub.s32 4294967266, %v2229
        %v2235 = vadd.s32 %v2234, 127
        %v2236 = vshll.u32 %v2235, 23
        %v2237 = vor.u32 4788187, %v2236
        %v2238 = vand.u32 2147483647, %v2237
        %v2240 = vcvt.s32.f32 %v2233
        %v2241 = vmul.f32 %v2240, %v2238
        %v2242 = vxor.u32 %v2241, 2147483648
        %v2243 = vsel %vm2160, %v2242, %v2241
        %v2244 = vsub.s32 4, %v2220
        %v2245 = vsel %vm2160, %v2244, %v2220
        %v2246 = vsel %vm2159, %v1812, %v2243
        %v2247 = vsel %vm2159, 0, %v2245
        %v2248 = vcosq.f32.pop %v2246
        %v2249 = vsinq.f32.pop %v2246
        %vm2250 = vweird.f32 %v1812
        %v2251 = vand.u32 %v2247, 3
        %vm2252 = vcmp.lt.s32.totalorder %v2251, 2
        %vm2253 = vcmp.eq.s32.totalorder %v2251, 0
        %v2254 = vxor.u32 %v2249, 2147483648
        %v2255 = vsel %vm2253, %v2248, %v2254
        %vm2256 = vcmp.eq.s32.totalorder %v2251, 2
        %v2257 = vxor.u32 %v2248, 2147483648
        %v2258 = vsel %vm2256, %v2257, %v2249
        %v2259 = vsel %vm2252, %v2255, %v2258
        %v2260 = vsel %vm2250, nan, %v2259
        %v2261 = vmul.f32 %v2050, %v2157
        %v2262 = vmul.f32 %v2050, %v2260
        %v2263 = vsub.f32 1.0, %v1821
        %v2265 = vlaneseq
        %v2266 = vshrl.u32 %v2265, 7
        %v2267 = vsub.s32 0, %v2266
        %v2268 = vrot.slane %v2263, %v2267
        %2269 = vset.pattern.permute.xlu0 0
        %2270 = vperm.xlu0 %2269, %v2268
        %v2271 = vpop.permute.xlu0 %2270
        %v2273 = vmul.f32 %v2271, %v1832
        %v2274 = vmul.f32 %v2271, %v1833
        %v2275 = vsel %vm2054, %v2261, %v2273
        %v2276 = vsel %vm2054, %v2262, %v2274
        %v2277 = vsel %vm1834, %v2052, %v2275
        %v2278 = vsel %vm1834, %v2053, %v2276
        %v2279 = vadd.f32 %v1745, %v2277
        %v2280 = vadd.f32 %v1746, %v2278
        %v2281 = vsel %vm660, %v2279, 0.0
        %2282 = vadd.xlane.f32.xlu0 %v2281
        %v2283 = vpop.xlane.xlu0 %2282
        %v2284 = vsel %vm660, %v2280, 0.0
        %2285 = vadd.xlane.f32.xlu0 %v2284
        %v2286 = vpop.xlane.xlu0 %2285
        %v2287 = vmul.f32 %v2283, %v1708
        %v2288 = vmul.f32 %v2286, %v1708
        %v2289 = vsub.f32 %v2279, %v2287
        %v2290 = vsub.f32 %v2280, %v2288
        %v2291 = vmul.f32 %v2289, %v2289
        %v2292 = vmul.f32 %v2290, %v2290
        %v2293 = vsel %vm660, %v2291, 0.0
        %2294 = vadd.xlane.f32.xlu0 %v2293
        %v2295 = vpop.xlane.xlu0 %2294
        %v2296 = vsel %vm660, %v2292, 0.0
        %2297 = vadd.xlane.f32.xlu0 %v2296
        %v2298 = vpop.xlane.xlu0 %2297
        %v2299 = vmul.f32 %v2295, %v1708
        %v2300 = vmul.f32 %v2298, %v1708
        %v2301 = vadd.f32 %v2299, 1e-05
        %v2302 = vadd.f32 %v2300, 1e-05
        %v2303 = vrsqrt.pop %v2301
        %v2304 = vrsqrt.pop %v2302
        %v2305 = vmul.f32 %v2289, %v2303
        %v2306 = vmul.f32 %v2290, %v2304
        %v2307 = vld [vmem:[%s620] sm:$0x1]
        %v2309 = vlaneseq
        %v2310 = vshrl.u32 %v2309, 7
        %v2311 = vsub.s32 0, %v2310
        %v2312 = vrot.slane %v2307, %v2311
        %v2314 = vmul.f32 %v2305, %v2312
        %v2315 = vmul.f32 %v2306, %v2312
        %v2316 = vld [vmem:[%s623] sm:$0x1]
        %v2318 = vlaneseq
        %v2319 = vshrl.u32 %v2318, 7
        %v2320 = vsub.s32 0, %v2319
        %v2321 = vrot.slane %v2316, %v2320
        %v2323 = vadd.f32 %v2314, %v2321
        %v2324 = vadd.f32 %v2315, %v2321
        %2325 = vst.msk [vmem:[#allocation11] sm:$0xff] %vm660, %v2323
        %2326 = vst.msk [vmem:[#allocation11 + $0x8] sm:$0xff] %vm660, %v2324
        // Predicated region
        $region89: #{tpu_custom_call.1} parent=67 // pred_check
          %p2327 = pneg %p351
        $region90: #{tpu_custom_call.1} parent=67 // pred_check_branch
          %2329 = sbr.rel (%p2327) target = $region92
        $region91: #{tpu_custom_call.1} parent=67 // pred_region
          %s2331 = ssub.s32 256, 256
          %2332 = vsyncadd [#allocation5], %s2331
          %s2333 = sshll.u32 [#allocation11], 4
          %s2334 = int_to_ptr.vmem [resolvable:$true] %s2333
          %2339 = dma.vmem_to_hbm [thread:$0]  %s2334, 256, %s12, [#allocation5], 128, 128, 8
        $region92: #{tpu_custom_call.1} parent=67 // pred_fallthru
          _
        // Predicated region
        $region93: #{tpu_custom_call.1} parent=67 // pred_check
          %p2340 = pneg %p351
        $region94: #{tpu_custom_call.1} parent=67 // pred_check_branch
          %2342 = sbr.rel (%p2340) target = $region96
        $region95: #{tpu_custom_call.1} parent=67 // pred_region
          %2343 = dma.done [#allocation5], 256
        $region96: #{tpu_custom_call.1} parent=67 // pred_fallthru
          _
      $region68: #{tpu_custom_call.1} parent=5 // pred_fallthru
        _
      %p2344 = scmp.le.s32.totalorder 2, %s26
      // Predicated region
      $region97: #{tpu_custom_call.1} parent=5 // pred_check
        %p2345 = pneg %p2344
      $region98: #{tpu_custom_call.1} parent=5 // pred_check_branch
        %2347 = sbr.rel (%p2345) target = $region100
      $region99: #{tpu_custom_call.1} parent=5 // pred_region
        %s2348 = ssub.s32 %s26, 2
      $region100: #{tpu_custom_call.1} parent=5 // pred_fallthru
        _
    $region6: #{tpu_custom_call.1} parent=1 // loop_footer
      %s30 = sadd.s32 1, %s26
    $region7: #{tpu_custom_call.1} parent=1 // loop_footer_branch
      %25 = sbr.rel target = $region3
    $region8: #{tpu_custom_call.1} parent=1 // loop_exit
      _
    %2349 = vsyncpa [#allocation4], 1
    %s2350 = scalar_lea.sflag [#allocation4], 1
    %2351 = vsyncpa %s2350, 1
    %2352 = vsyncpa [#allocation7], 1
    %s2353 = scalar_lea.sflag [#allocation7], 1
    %2354 = vsyncpa %s2353, 1
    %2355 = vsyncpa [#allocation10], 1
    %s2356 = scalar_lea.sflag [#allocation10], 1
    %2357 = vsyncpa %s2356, 1
    %2358 = vsyncpa [#allocation5], 1
    %s2359 = scalar_lea.sflag [#allocation5], 1
    %2360 = vsyncpa %s2359, 1

</llo_original>
